<compile_context>
chip_gen: v7x
topology: tpu7x:2x2x1
jax: 0.10.0
libtpu: 0.0.40
codegen_flags: <defaults>
</compile_context>

<pallas_src>
import functools

import jax
import jax.numpy as jnp
import numpy as np
from jax.experimental import pallas as pl
from jax.experimental.pallas import tpu as pltpu

LANE = 128                      # TPU lane width; channel dims padded to this
MATMUL_DTYPE = jnp.float32      # set to jnp.bfloat16 on v6e/v7x for ~2x MXU throughput
                                # (kept f32 here to match PyTorch f32 numerics tightly)
VMEM_LIMIT = 32 * 1024 * 1024   # explicit scoped-VMEM budget, safe on v5e/v6e/v7x
EPS = 1e-5                      # BatchNorm2d eps (PyTorch default)


def _round_up(x, m):
    return (x + m - 1) // m * m


# --------------------------------------------------------------------------
# Stage 1: fused maxpool + conv1 + BN1 batch statistics.
# Grid: (N,) - one image per step; stats accumulate across the grid
# (output scale/shift blocks are revisited), so the axis is "arbitrary".
# --------------------------------------------------------------------------
def _pool_conv_stats_kernel(x00_ref, x01_ref, x10_ref, x11_ref,
                            w_ref, g_ref, beta_ref,
                            y_ref, scale_ref, shift_ref,
                            sum_sc, sumsq_sc,
                            *, ho, wo, inv_m):
    n = pl.program_id(0)

    @pl.when(n == 0)
    def _init():
        sum_sc[...] = jnp.zeros_like(sum_sc)
        sumsq_sc[...] = jnp.zeros_like(sumsq_sc)

    # Fused MaxPool2d(2): 4-way max over the 2x2-window offsets.  Pure VPU
    # work that hides under the MXU matmuls below; the pooled activation
    # never round-trips through HBM.
    pooled = jnp.maximum(jnp.maximum(x00_ref[...], x01_ref[...]),
                         jnp.maximum(x10_ref[...], x11_ref[...]))   # [Hp, Wp, Cin]

    # 3x3 "valid" conv as 9 shifted-slice matmuls accumulated in f32
    # (no im2col patch matrix in HBM).  Conv bias dropped: it is exactly
    # cancelled by the BatchNorm batch-mean subtraction.
    cpad = y_ref.shape[-1]
    acc = jnp.zeros((ho * wo, cpad), jnp.float32)
    for kh in range(3):
        for kw in range(3):
            lhs = pooled[kh:kh + ho, kw:kw + wo, :].reshape(ho * wo, -1)
            acc = acc + jnp.dot(lhs.astype(w_ref.dtype), w_ref[kh * 3 + kw],
                                preferred_element_type=jnp.float32)

    y_ref[...] = acc.reshape(ho, wo, cpad)

    # Single-pass BN batch statistics (sum and sum of squares, f32).
    sum_sc[...] += jnp.sum(acc, axis=0, keepdims=True)
    sumsq_sc[...] += jnp.sum(acc * acc, axis=0, keepdims=True)

    # Folded BN scale/shift: scale = g * rsqrt(var + eps), shift = beta - mean*scale.
    # Written every step; only the last grid step's value survives in HBM
    # (the [1, Cpad] output blocks are grid-resident).
    mean = sum_sc[...] * inv_m
    var = sumsq_sc[...] * inv_m - mean * mean
    scale = g_ref[...] * jax.lax.rsqrt(var + EPS)
    scale_ref[...] = scale
    shift_ref[...] = beta_ref[...] - mean * scale


# --------------------------------------------------------------------------
# Stage 2: BN1 + ReLU1 (folded scale/shift) + conv2 + BN2 batch statistics.
# --------------------------------------------------------------------------
def _bnrelu_conv_stats_kernel(y_ref, s_ref, t_ref,
                              w_ref, g_ref, beta_ref,
                              o_ref, scale_ref, shift_ref,
                              sum_sc, sumsq_sc,
                              *, ho, wo, inv_m):
    n = pl.program_id(0)

    @pl.when(n == 0)
    def _init():
        sum_sc[...] = jnp.zeros_like(sum_sc)
        sumsq_sc[...] = jnp.zeros_like(sumsq_sc)

    # BatchNorm1 (folded per-channel scale/shift) + ReLU on the loaded tile.
    z = jnp.maximum(y_ref[...] * s_ref[...] + t_ref[...], 0.0)       # [H1, W1, Cpad]

    cpad = o_ref.shape[-1]
    acc = jnp.zeros((ho * wo, cpad), jnp.float32)
    for kh in range(3):
        for kw in range(3):
            lhs = z[kh:kh + ho, kw:kw + wo, :].reshape(ho * wo, -1)
            acc = acc + jnp.dot(lhs.astype(w_ref.dtype), w_ref[kh * 3 + kw],
                                preferred_element_type=jnp.float32)

    o_ref[...] = acc                                                  # [H2*W2, Cpad]

    sum_sc[...] += jnp.sum(acc, axis=0, keepdims=True)
    sumsq_sc[...] += jnp.sum(acc * acc, axis=0, keepdims=True)

    mean = sum_sc[...] * inv_m
    var = sumsq_sc[...] * inv_m - mean * mean
    scale = g_ref[...] * jax.lax.rsqrt(var + EPS)
    scale_ref[...] = scale
    shift_ref[...] = beta_ref[...] - mean * scale


# --------------------------------------------------------------------------
# Stage 3: BN2 + ReLU2 (elementwise, per-channel scale/shift).
# --------------------------------------------------------------------------
def _bn_relu_kernel(y_ref, s_ref, t_ref, o_ref):
    o_ref[...] = jnp.maximum(y_ref[...] * s_ref[...] + t_ref[...], 0.0)


# ------------------------------ wrapper glue --------------------------------

def _prep_conv_weight(w_oihw, cin_pad, cout_pad):
    # [Cout, Cin, 3, 3] -> [9, cin_pad, cout_pad], tap order (kh, kw), zero padded
    cout, cin, kh, kw = w_oihw.shape
    w = jnp.transpose(w_oihw, (2, 3, 1, 0)).reshape(kh * kw, cin, cout)
    w = jnp.pad(w, ((0, 0), (0, cin_pad - cin), (0, cout_pad - cout)))
    return w.astype(MATMUL_DTYPE)


def _prep_bn_param(p, cpad):
    # pad with zeros so padded channels produce exact zeros after BN+ReLU
    return jnp.pad(p.astype(jnp.float32), (0, cpad - p.shape[0])).reshape(1, cpad)


def down_forward(x_nchw, params):
    x = jnp.transpose(x_nchw, (0, 2, 3, 1)).astype(jnp.float32)       # NHWC
    N, H, W, Cin = x.shape
    Hp, Wp = H // 2, W // 2
    H1, W1 = Hp - 2, Wp - 2            # after conv1 (valid)
    H2, W2 = H1 - 2, W1 - 2            # after conv2 (valid)
    Cout = params["w1"].shape[0]
    Cpad = _round_up(Cout, LANE)       # lane-dense channel dimension

    w1 = _prep_conv_weight(params["w1"], Cin, Cpad)     # [9, Cin,  Cpad]
    w2 = _prep_conv_weight(params["w2"], Cpad, Cpad)    # [9, Cpad, Cpad]
    g1, be1 = _prep_bn_param(params["g1"], Cpad), _prep_bn_param(params["beta1"], Cpad)
    g2, be2 = _prep_bn_param(params["g2"], Cpad), _prep_bn_param(params["beta2"], Cpad)
    # NOTE: conv biases b1/b2 intentionally unused -- training-mode BatchNorm
    # subtracts the batch mean, which cancels a constant per-channel bias.

    # 2x2-window offsets of the input (cheap wrapper glue; the max itself runs
    # fused inside stage-1, and the pooled tensor never hits HBM).
    # TODO(synk): replace with in-kernel strided/halo loads to drop this copy.
    x00 = x[:, 0::2, 0::2, :]
    x01 = x[:, 0::2, 1::2, :]
    x10 = x[:, 1::2, 0::2, :]
    x11 = x[:, 1::2, 1::2, :]

    vec_spec = pl.BlockSpec((1, Cpad), lambda n: (0, 0))
    off_spec = pl.BlockSpec((None, Hp, Wp, Cin), lambda n: (n, 0, 0, 0))

    # ---- stage 1: maxpool + conv1 + BN1 batch stats -------------------------
    y1, s1, t1 = pl.pallas_call(
        functools.partial(_pool_conv_stats_kernel, ho=H1, wo=W1,
                          inv_m=1.0 / float(N * H1 * W1)),
        grid=(N,),
        in_specs=[off_spec, off_spec, off_spec, off_spec,
                  pl.BlockSpec((9, Cin, Cpad), lambda n: (0, 0, 0)),
                  vec_spec, vec_spec],
        out_specs=[pl.BlockSpec((None, H1, W1, Cpad), lambda n: (n, 0, 0, 0)),
                   vec_spec, vec_spec],
        out_shape=[jax.ShapeDtypeStruct((N, H1, W1, Cpad), jnp.float32),
                   jax.ShapeDtypeStruct((1, Cpad), jnp.float32),
                   jax.ShapeDtypeStruct((1, Cpad), jnp.float32)],
        scratch_shapes=[pltpu.VMEM((1, Cpad), jnp.float32),
                        pltpu.VMEM((1, Cpad), jnp.float32)],
        compiler_params=pltpu.CompilerParams(
            dimension_semantics=("arbitrary",),      # stats accumulate across grid
            vmem_limit_bytes=VMEM_LIMIT),
    )(x00, x01, x10, x11, w1, g1, be1)

    # ---- stage 2: BN1+ReLU1 + conv2 + BN2 batch stats -----------------------
    y2, s2, t2 = pl.pallas_call(
        functools.partial(_bnrelu_conv_stats_kernel, ho=H2, wo=W2,
                          inv_m=1.0 / float(N * H2 * W2)),
        grid=(N,),
        in_specs=[pl.BlockSpec((None, H1, W1, Cpad), lambda n: (n, 0, 0, 0)),
                  vec_spec, vec_spec,
                  pl.BlockSpec((9, Cpad, Cpad), lambda n: (0, 0, 0)),
                  vec_spec, vec_spec],
        out_specs=[pl.BlockSpec((None, H2 * W2, Cpad), lambda n: (n, 0, 0)),
                   vec_spec, vec_spec],
        out_shape=[jax.ShapeDtypeStruct((N, H2 * W2, Cpad), jnp.float32),
                   jax.ShapeDtypeStruct((1, Cpad), jnp.float32),
                   jax.ShapeDtypeStruct((1, Cpad), jnp.float32)],
        scratch_shapes=[pltpu.VMEM((1, Cpad), jnp.float32),
                        pltpu.VMEM((1, Cpad), jnp.float32)],
        compiler_params=pltpu.CompilerParams(
            dimension_semantics=("arbitrary",),
            vmem_limit_bytes=VMEM_LIMIT),
    )(y1, s1, t1, w2, g2, be2)

    # ---- stage 3: BN2 + ReLU2 ----------------------------------------------
    out = pl.pallas_call(
        _bn_relu_kernel,
        grid=(N,),
        in_specs=[pl.BlockSpec((None, H2 * W2, Cpad), lambda n: (n, 0, 0)),
                  vec_spec, vec_spec],
        out_specs=pl.BlockSpec((None, H2 * W2, Cpad), lambda n: (n, 0, 0)),
        out_shape=jax.ShapeDtypeStruct((N, H2 * W2, Cpad), jnp.float32),
        compiler_params=pltpu.CompilerParams(
            dimension_semantics=("parallel",),       # shards across TCs on v7x
            vmem_limit_bytes=VMEM_LIMIT),
    )(y2, s2, t2)

    out = out.reshape(N, H2, W2, Cpad)[:, :, :, :Cout]
    return jnp.transpose(out, (0, 3, 1, 2))          # back to NCHW


# --------------------------- pure-JAX reference ------------------------------

def reference_down(x_nchw, params):
    x = jnp.transpose(x_nchw, (0, 2, 3, 1)).astype(jnp.float32)
    x = jax.lax.reduce_window(x, -jnp.inf, jax.lax.max,
                              (1, 2, 2, 1), (1, 2, 2, 1), "VALID")

    def block(y, w_oihw, b, g, beta):
        w_hwio = jnp.transpose(w_oihw, (2, 3, 1, 0))
        y = jax.lax.conv_general_dilated(
            y, w_hwio, (1, 1), "VALID",
            dimension_numbers=("NHWC", "HWIO", "NHWC")) + b
        mean = jnp.mean(y, axis=(0, 1, 2), keepdims=True)
        var = jnp.mean((y - mean) ** 2, axis=(0, 1, 2), keepdims=True)
        y = (y - mean) * jax.lax.rsqrt(var + EPS) * g + beta
        return jnp.maximum(y, 0.0)

    y = block(x, params["w1"], params["b1"], params["g1"], params["beta1"])
    y = block(y, params["w2"], params["b2"], params["g2"], params["beta2"])
    return jnp.transpose(y, (0, 3, 1, 2))


# ---------------------------------- main -------------------------------------

if __name__ == "__main__":
    key = jax.random.PRNGKey(0)
    k_x, k_w1, k_b1, k_w2, k_b2 = jax.random.split(key, 5)

    N, Cin, H, W = 2, 4, 16, 16   # input  [2, 4, 16, 16]
    Cout = 8                      # Down(4, 8) -> output [2, 8, 4, 4]

    x = jax.random.normal(k_x, (N, Cin, H, W), jnp.float32)
    params = {
        "w1": 0.1 * jax.random.normal(k_w1, (Cout, Cin, 3, 3), jnp.float32),
        "b1": 0.1 * jax.random.normal(k_b1, (Cout,), jnp.float32),
        "g1": jnp.ones((Cout,), jnp.float32),      # BatchNorm weight init (PyTorch)
        "beta1": jnp.zeros((Cout,), jnp.float32),  # BatchNorm bias init (PyTorch)
        "w2": 0.1 * jax.random.normal(k_w2, (Cout, Cout, 3, 3), jnp.float32),
        "b2": 0.1 * jax.random.normal(k_b2, (Cout,), jnp.float32),
        "g2": jnp.ones((Cout,), jnp.float32),
        "beta2": jnp.zeros((Cout,), jnp.float32),
    }

    out = jax.block_until_ready(down_forward(x, params))
    ref = jax.block_until_ready(reference_down(x, params))

    assert out.shape == (N, Cout, H // 2 - 4, W // 2 - 4), out.shape
    np.testing.assert_allclose(np.asarray(out), np.asarray(ref), rtol=1e-4, atol=1e-4)
    print("KERNEL_OK")
</pallas_src>

<mosaic_0001>
module attributes {stable_mosaic.version = 11 : i64} {
  func.func @_pool_conv_stats_kernel(%arg0: i32, %arg1: memref<1x8x8x4xf32, #tpu.memory_space<vmem>>, %arg2: memref<1x8x8x4xf32, #tpu.memory_space<vmem>>, %arg3: memref<1x8x8x4xf32, #tpu.memory_space<vmem>>, %arg4: memref<1x8x8x4xf32, #tpu.memory_space<vmem>>, %arg5: memref<9x4x128xf32, #tpu.memory_space<vmem>>, %arg6: memref<1x128xf32, #tpu.memory_space<vmem>>, %arg7: memref<1x128xf32, #tpu.memory_space<vmem>>, %arg8: memref<1x6x6x128xf32, #tpu.memory_space<vmem>>, %arg9: memref<1x128xf32, #tpu.memory_space<vmem>>, %arg10: memref<1x128xf32, #tpu.memory_space<vmem>>, %arg11: memref<1x128xf32, #tpu.memory_space<vmem>>, %arg12: memref<1x128xf32, #tpu.memory_space<vmem>>) attributes {dimension_semantics = [#tpu.dimension_semantics<arbitrary>], iteration_bounds = array<i64: 2>, scalar_prefetch = 0 : i64, scratch_operands = 2 : i64, tpu.core_type = #tpu.core_type<tc>, window_params = [{transform_indices = @transform_0, window_bounds = array<i64: 1, 8, 8, 4>}, {transform_indices = @transform_1, window_bounds = array<i64: 1, 8, 8, 4>}, {transform_indices = @transform_2, window_bounds = array<i64: 1, 8, 8, 4>}, {transform_indices = @transform_3, window_bounds = array<i64: 1, 8, 8, 4>}, {pipeline_mode = #tpu.pipeline_mode<synchronous>, transform_indices = @transform_4, window_bounds = array<i64: 9, 4, 128>}, {pipeline_mode = #tpu.pipeline_mode<synchronous>, transform_indices = @transform_5, window_bounds = array<i64: 1, 128>}, {pipeline_mode = #tpu.pipeline_mode<synchronous>, transform_indices = @transform_6, window_bounds = array<i64: 1, 128>}, {transform_indices = @transform_7, window_bounds = array<i64: 1, 6, 6, 128>}, {pipeline_mode = #tpu.pipeline_mode<synchronous>, transform_indices = @transform_8, window_bounds = array<i64: 1, 128>}, {pipeline_mode = #tpu.pipeline_mode<synchronous>, transform_indices = @transform_9, window_bounds = array<i64: 1, 128>}]} {
    %c0_i32 = arith.constant 0 : i32
    %0 = arith.cmpi eq, %arg0, %c0_i32 : i32
    %1 = arith.extui %0 : i1 to i32
    %c0_i32_0 = arith.constant 0 : i32
    %2 = arith.cmpi ne, %1, %c0_i32_0 : i32
    scf.if %2 {
      %cst_73 = arith.constant 0.000000e+00 : f32
      %102 = vector.broadcast %cst_73 : f32 to vector<1x128xf32>
      %c0_74 = arith.constant 0 : index
      %c0_75 = arith.constant 0 : index
      %103 = vector.load %arg11[%c0_74, %c0_75] : memref<1x128xf32, #tpu.memory_space<vmem>>, vector<1x128xf32>
      tpu.vector_store %arg11[%c0_74, %c0_75], %102 {strides = array<i32>} : memref<1x128xf32, #tpu.memory_space<vmem>>, vector<1x128xf32>,
      %cst_76 = arith.constant 0.000000e+00 : f32
      %104 = vector.broadcast %cst_76 : f32 to vector<1x128xf32>
      %c0_77 = arith.constant 0 : index
      %c0_78 = arith.constant 0 : index
      %105 = vector.load %arg12[%c0_77, %c0_78] : memref<1x128xf32, #tpu.memory_space<vmem>>, vector<1x128xf32>
      tpu.vector_store %arg12[%c0_77, %c0_78], %104 {strides = array<i32>} : memref<1x128xf32, #tpu.memory_space<vmem>>, vector<1x128xf32>,
    } else {
    }
    %c0 = arith.constant 0 : index
    %c0_1 = arith.constant 0 : index
    %c0_2 = arith.constant 0 : index
    %c0_3 = arith.constant 0 : index
    %3 = vector.load %arg1[%c0, %c0_1, %c0_2, %c0_3] : memref<1x8x8x4xf32, #tpu.memory_space<vmem>>, vector<1x8x8x4xf32>
    %4 = vector.shape_cast %3 : vector<1x8x8x4xf32> to vector<8x8x4xf32>
    %c0_4 = arith.constant 0 : index
    %c0_5 = arith.constant 0 : index
    %c0_6 = arith.constant 0 : index
    %c0_7 = arith.constant 0 : index
    %5 = vector.load %arg2[%c0_4, %c0_5, %c0_6, %c0_7] : memref<1x8x8x4xf32, #tpu.memory_space<vmem>>, vector<1x8x8x4xf32>
    %6 = vector.shape_cast %5 : vector<1x8x8x4xf32> to vector<8x8x4xf32>
    %7 = arith.maximumf %4, %6 : vector<8x8x4xf32>
    %c0_8 = arith.constant 0 : index
    %c0_9 = arith.constant 0 : index
    %c0_10 = arith.constant 0 : index
    %c0_11 = arith.constant 0 : index
    %8 = vector.load %arg3[%c0_8, %c0_9, %c0_10, %c0_11] : memref<1x8x8x4xf32, #tpu.memory_space<vmem>>, vector<1x8x8x4xf32>
    %9 = vector.shape_cast %8 : vector<1x8x8x4xf32> to vector<8x8x4xf32>
    %c0_12 = arith.constant 0 : index
    %c0_13 = arith.constant 0 : index
    %c0_14 = arith.constant 0 : index
    %c0_15 = arith.constant 0 : index
    %10 = vector.load %arg4[%c0_12, %c0_13, %c0_14, %c0_15] : memref<1x8x8x4xf32, #tpu.memory_space<vmem>>, vector<1x8x8x4xf32>
    %11 = vector.shape_cast %10 : vector<1x8x8x4xf32> to vector<8x8x4xf32>
    %12 = arith.maximumf %9, %11 : vector<8x8x4xf32>
    %13 = arith.maximumf %7, %12 : vector<8x8x4xf32>
    %cst = arith.constant 0.000000e+00 : f32
    %14 = vector.broadcast %cst : f32 to vector<36x128xf32>
    %15 = vector.extract_strided_slice %13 {offsets = [0, 0, 0], sizes = [6, 6, 4], strides = [1, 1, 1]} : vector<8x8x4xf32> to vector<6x6x4xf32>
    %16 = vector.shape_cast %15 : vector<6x6x4xf32> to vector<36x4xf32>
    %c0_16 = arith.constant 0 : index
    %c0_17 = arith.constant 0 : index
    %c0_18 = arith.constant 0 : index
    %17 = vector.load %arg5[%c0_16, %c0_17, %c0_18] : memref<9x4x128xf32, #tpu.memory_space<vmem>>, vector<1x4x128xf32>
    %18 = vector.shape_cast %17 : vector<1x4x128xf32> to vector<4x128xf32>
    %cst_19 = arith.constant dense<0.000000e+00> : vector<36x128xf32>
    %19 = tpu.matmul %16, %18, %cst_19 {dimension_numbers = #tpu.dot_dimension_numbers<[1], [0], [0], [1], [0, 0, 1, 1], [], []>} : vector<36x4xf32>, vector<4x128xf32>, vector<36x128xf32> -> vector<36x128xf32>
    %20 = arith.addf %14, %19 : vector<36x128xf32>
    %21 = vector.extract_strided_slice %13 {offsets = [0, 1, 0], sizes = [6, 6, 4], strides = [1, 1, 1]} : vector<8x8x4xf32> to vector<6x6x4xf32>
    %22 = vector.shape_cast %21 : vector<6x6x4xf32> to vector<36x4xf32>
    %c1 = arith.constant 1 : index
    %c0_20 = arith.constant 0 : index
    %c0_21 = arith.constant 0 : index
    %23 = vector.load %arg5[%c1, %c0_20, %c0_21] : memref<9x4x128xf32, #tpu.memory_space<vmem>>, vector<1x4x128xf32>
    %24 = vector.shape_cast %23 : vector<1x4x128xf32> to vector<4x128xf32>
    %cst_22 = arith.constant dense<0.000000e+00> : vector<36x128xf32>
    %25 = tpu.matmul %22, %24, %cst_22 {dimension_numbers = #tpu.dot_dimension_numbers<[1], [0], [0], [1], [0, 0, 1, 1], [], []>} : vector<36x4xf32>, vector<4x128xf32>, vector<36x128xf32> -> vector<36x128xf32>
    %26 = arith.addf %20, %25 : vector<36x128xf32>
    %27 = vector.extract_strided_slice %13 {offsets = [0, 2, 0], sizes = [6, 6, 4], strides = [1, 1, 1]} : vector<8x8x4xf32> to vector<6x6x4xf32>
    %28 = vector.shape_cast %27 : vector<6x6x4xf32> to vector<36x4xf32>
    %c2 = arith.constant 2 : index
    %c0_23 = arith.constant 0 : index
    %c0_24 = arith.constant 0 : index
    %29 = vector.load %arg5[%c2, %c0_23, %c0_24] : memref<9x4x128xf32, #tpu.memory_space<vmem>>, vector<1x4x128xf32>
    %30 = vector.shape_cast %29 : vector<1x4x128xf32> to vector<4x128xf32>
    %cst_25 = arith.constant dense<0.000000e+00> : vector<36x128xf32>
    %31 = tpu.matmul %28, %30, %cst_25 {dimension_numbers = #tpu.dot_dimension_numbers<[1], [0], [0], [1], [0, 0, 1, 1], [], []>} : vector<36x4xf32>, vector<4x128xf32>, vector<36x128xf32> -> vector<36x128xf32>
    %32 = arith.addf %26, %31 : vector<36x128xf32>
    %33 = vector.extract_strided_slice %13 {offsets = [1, 0, 0], sizes = [6, 6, 4], strides = [1, 1, 1]} : vector<8x8x4xf32> to vector<6x6x4xf32>
    %34 = vector.shape_cast %33 : vector<6x6x4xf32> to vector<36x4xf32>
    %c3 = arith.constant 3 : index
    %c0_26 = arith.constant 0 : index
    %c0_27 = arith.constant 0 : index
    %35 = vector.load %arg5[%c3, %c0_26, %c0_27] : memref<9x4x128xf32, #tpu.memory_space<vmem>>, vector<1x4x128xf32>
    %36 = vector.shape_cast %35 : vector<1x4x128xf32> to vector<4x128xf32>
    %cst_28 = arith.constant dense<0.000000e+00> : vector<36x128xf32>
    %37 = tpu.matmul %34, %36, %cst_28 {dimension_numbers = #tpu.dot_dimension_numbers<[1], [0], [0], [1], [0, 0, 1, 1], [], []>} : vector<36x4xf32>, vector<4x128xf32>, vector<36x128xf32> -> vector<36x128xf32>
    %38 = arith.addf %32, %37 : vector<36x128xf32>
    %39 = vector.extract_strided_slice %13 {offsets = [1, 1, 0], sizes = [6, 6, 4], strides = [1, 1, 1]} : vector<8x8x4xf32> to vector<6x6x4xf32>
    %40 = vector.shape_cast %39 : vector<6x6x4xf32> to vector<36x4xf32>
    %c4 = arith.constant 4 : index
    %c0_29 = arith.constant 0 : index
    %c0_30 = arith.constant 0 : index
    %41 = vector.load %arg5[%c4, %c0_29, %c0_30] : memref<9x4x128xf32, #tpu.memory_space<vmem>>, vector<1x4x128xf32>
    %42 = vector.shape_cast %41 : vector<1x4x128xf32> to vector<4x128xf32>
    %cst_31 = arith.constant dense<0.000000e+00> : vector<36x128xf32>
    %43 = tpu.matmul %40, %42, %cst_31 {dimension_numbers = #tpu.dot_dimension_numbers<[1], [0], [0], [1], [0, 0, 1, 1], [], []>} : vector<36x4xf32>, vector<4x128xf32>, vector<36x128xf32> -> vector<36x128xf32>
    %44 = arith.addf %38, %43 : vector<36x128xf32>
    %45 = vector.extract_strided_slice %13 {offsets = [1, 2, 0], sizes = [6, 6, 4], strides = [1, 1, 1]} : vector<8x8x4xf32> to vector<6x6x4xf32>
    %46 = vector.shape_cast %45 : vector<6x6x4xf32> to vector<36x4xf32>
    %c5 = arith.constant 5 : index
    %c0_32 = arith.constant 0 : index
    %c0_33 = arith.constant 0 : index
    %47 = vector.load %arg5[%c5, %c0_32, %c0_33] : memref<9x4x128xf32, #tpu.memory_space<vmem>>, vector<1x4x128xf32>
    %48 = vector.shape_cast %47 : vector<1x4x128xf32> to vector<4x128xf32>
    %cst_34 = arith.constant dense<0.000000e+00> : vector<36x128xf32>
    %49 = tpu.matmul %46, %48, %cst_34 {dimension_numbers = #tpu.dot_dimension_numbers<[1], [0], [0], [1], [0, 0, 1, 1], [], []>} : vector<36x4xf32>, vector<4x128xf32>, vector<36x128xf32> -> vector<36x128xf32>
    %50 = arith.addf %44, %49 : vector<36x128xf32>
    %51 = vector.extract_strided_slice %13 {offsets = [2, 0, 0], sizes = [6, 6, 4], strides = [1, 1, 1]} : vector<8x8x4xf32> to vector<6x6x4xf32>
    %52 = vector.shape_cast %51 : vector<6x6x4xf32> to vector<36x4xf32>
    %c6 = arith.constant 6 : index
    %c0_35 = arith.constant 0 : index
    %c0_36 = arith.constant 0 : index
    %53 = vector.load %arg5[%c6, %c0_35, %c0_36] : memref<9x4x128xf32, #tpu.memory_space<vmem>>, vector<1x4x128xf32>
    %54 = vector.shape_cast %53 : vector<1x4x128xf32> to vector<4x128xf32>
    %cst_37 = arith.constant dense<0.000000e+00> : vector<36x128xf32>
    %55 = tpu.matmul %52, %54, %cst_37 {dimension_numbers = #tpu.dot_dimension_numbers<[1], [0], [0], [1], [0, 0, 1, 1], [], []>} : vector<36x4xf32>, vector<4x128xf32>, vector<36x128xf32> -> vector<36x128xf32>
    %56 = arith.addf %50, %55 : vector<36x128xf32>
    %57 = vector.extract_strided_slice %13 {offsets = [2, 1, 0], sizes = [6, 6, 4], strides = [1, 1, 1]} : vector<8x8x4xf32> to vector<6x6x4xf32>
    %58 = vector.shape_cast %57 : vector<6x6x4xf32> to vector<36x4xf32>
    %c7 = arith.constant 7 : index
    %c0_38 = arith.constant 0 : index
    %c0_39 = arith.constant 0 : index
    %59 = vector.load %arg5[%c7, %c0_38, %c0_39] : memref<9x4x128xf32, #tpu.memory_space<vmem>>, vector<1x4x128xf32>
    %60 = vector.shape_cast %59 : vector<1x4x128xf32> to vector<4x128xf32>
    %cst_40 = arith.constant dense<0.000000e+00> : vector<36x128xf32>
    %61 = tpu.matmul %58, %60, %cst_40 {dimension_numbers = #tpu.dot_dimension_numbers<[1], [0], [0], [1], [0, 0, 1, 1], [], []>} : vector<36x4xf32>, vector<4x128xf32>, vector<36x128xf32> -> vector<36x128xf32>
    %62 = arith.addf %56, %61 : vector<36x128xf32>
    %63 = vector.extract_strided_slice %13 {offsets = [2, 2, 0], sizes = [6, 6, 4], strides = [1, 1, 1]} : vector<8x8x4xf32> to vector<6x6x4xf32>
    %64 = vector.shape_cast %63 : vector<6x6x4xf32> to vector<36x4xf32>
    %c8 = arith.constant 8 : index
    %c0_41 = arith.constant 0 : index
    %c0_42 = arith.constant 0 : index
    %65 = vector.load %arg5[%c8, %c0_41, %c0_42] : memref<9x4x128xf32, #tpu.memory_space<vmem>>, vector<1x4x128xf32>
    %66 = vector.shape_cast %65 : vector<1x4x128xf32> to vector<4x128xf32>
    %cst_43 = arith.constant dense<0.000000e+00> : vector<36x128xf32>
    %67 = tpu.matmul %64, %66, %cst_43 {dimension_numbers = #tpu.dot_dimension_numbers<[1], [0], [0], [1], [0, 0, 1, 1], [], []>} : vector<36x4xf32>, vector<4x128xf32>, vector<36x128xf32> -> vector<36x128xf32>
    %68 = arith.addf %62, %67 : vector<36x128xf32>
    %69 = vector.shape_cast %68 : vector<36x128xf32> to vector<6x6x128xf32>
    %c0_44 = arith.constant 0 : index
    %c0_45 = arith.constant 0 : index
    %c0_46 = arith.constant 0 : index
    %c0_47 = arith.constant 0 : index
    %70 = vector.load %arg8[%c0_44, %c0_45, %c0_46, %c0_47] : memref<1x6x6x128xf32, #tpu.memory_space<vmem>>, vector<1x6x6x128xf32>
    %71 = vector.shape_cast %70 : vector<1x6x6x128xf32> to vector<6x6x128xf32>
    %72 = vector.shape_cast %69 : vector<6x6x128xf32> to vector<1x6x6x128xf32>
    tpu.vector_store %arg8[%c0_44, %c0_45, %c0_46, %c0_47], %72 {strides = array<i32>} : memref<1x6x6x128xf32, #tpu.memory_space<vmem>>, vector<1x6x6x128xf32>,
    %c0_48 = arith.constant 0 : index
    %c0_49 = arith.constant 0 : index
    %73 = vector.load %arg11[%c0_48, %c0_49] : memref<1x128xf32, #tpu.memory_space<vmem>>, vector<1x128xf32>
    %cst_50 = arith.constant dense<0.000000e+00> : vector<128xf32>
    %74 = vector.multi_reduction <add>, %68, %cst_50 [0] : vector<36x128xf32> to vector<128xf32>
    %75 = vector.shape_cast %74 : vector<128xf32> to vector<1x128xf32>
    %76 = arith.addf %73, %75 : vector<1x128xf32>
    %c0_51 = arith.constant 0 : index
    %c0_52 = arith.constant 0 : index
    %77 = vector.load %arg11[%c0_51, %c0_52] : memref<1x128xf32, #tpu.memory_space<vmem>>, vector<1x128xf32>
    tpu.vector_store %arg11[%c0_51, %c0_52], %76 {strides = array<i32>} : memref<1x128xf32, #tpu.memory_space<vmem>>, vector<1x128xf32>,
    %c0_53 = arith.constant 0 : index
    %c0_54 = arith.constant 0 : index
    %78 = vector.load %arg12[%c0_53, %c0_54] : memref<1x128xf32, #tpu.memory_space<vmem>>, vector<1x128xf32>
    %79 = arith.mulf %68, %68 : vector<36x128xf32>
    %cst_55 = arith.constant dense<0.000000e+00> : vector<128xf32>
    %80 = vector.multi_reduction <add>, %79, %cst_55 [0] : vector<36x128xf32> to vector<128xf32>
    %81 = vector.shape_cast %80 : vector<128xf32> to vector<1x128xf32>
    %82 = arith.addf %78, %81 : vector<1x128xf32>
    %c0_56 = arith.constant 0 : index
    %c0_57 = arith.constant 0 : index
    %83 = vector.load %arg12[%c0_56, %c0_57] : memref<1x128xf32, #tpu.memory_space<vmem>>, vector<1x128xf32>
    tpu.vector_store %arg12[%c0_56, %c0_57], %82 {strides = array<i32>} : memref<1x128xf32, #tpu.memory_space<vmem>>, vector<1x128xf32>,
    %c0_58 = arith.constant 0 : index
    %c0_59 = arith.constant 0 : index
    %84 = vector.load %arg11[%c0_58, %c0_59] : memref<1x128xf32, #tpu.memory_space<vmem>>, vector<1x128xf32>
    %cst_60 = arith.constant 0.013888889 : f32
    %85 = vector.broadcast %cst_60 : f32 to vector<1x128xf32>
    %86 = arith.mulf %84, %85 : vector<1x128xf32>
    %c0_61 = arith.constant 0 : index
    %c0_62 = arith.constant 0 : index
    %87 = vector.load %arg12[%c0_61, %c0_62] : memref<1x128xf32, #tpu.memory_space<vmem>>, vector<1x128xf32>
    %cst_63 = arith.constant 0.013888889 : f32
    %88 = vector.broadcast %cst_63 : f32 to vector<1x128xf32>
    %89 = arith.mulf %87, %88 : vector<1x128xf32>
    %90 = arith.mulf %86, %86 : vector<1x128xf32>
    %91 = arith.subf %89, %90 : vector<1x128xf32>
    %c0_64 = arith.constant 0 : index
    %c0_65 = arith.constant 0 : index
    %92 = vector.load %arg6[%c0_64, %c0_65] : memref<1x128xf32, #tpu.memory_space<vmem>>, vector<1x128xf32>
    %cst_66 = arith.constant 9.99999974E-6 : f32
    %93 = vector.broadcast %cst_66 : f32 to vector<1x128xf32>
    %94 = arith.addf %91, %93 : vector<1x128xf32>
    %95 = math.rsqrt %94 : vector<1x128xf32>
    %96 = arith.mulf %92, %95 : vector<1x128xf32>
    %c0_67 = arith.constant 0 : index
    %c0_68 = arith.constant 0 : index
    %97 = vector.load %arg9[%c0_67, %c0_68] : memref<1x128xf32, #tpu.memory_space<vmem>>, vector<1x128xf32>
    tpu.vector_store %arg9[%c0_67, %c0_68], %96 {strides = array<i32>} : memref<1x128xf32, #tpu.memory_space<vmem>>, vector<1x128xf32>,
    %c0_69 = arith.constant 0 : index
    %c0_70 = arith.constant 0 : index
    %98 = vector.load %arg7[%c0_69, %c0_70] : memref<1x128xf32, #tpu.memory_space<vmem>>, vector<1x128xf32>
    %99 = arith.mulf %86, %96 : vector<1x128xf32>
    %100 = arith.subf %98, %99 : vector<1x128xf32>
    %c0_71 = arith.constant 0 : index
    %c0_72 = arith.constant 0 : index
    %101 = vector.load %arg10[%c0_71, %c0_72] : memref<1x128xf32, #tpu.memory_space<vmem>>, vector<1x128xf32>
    tpu.vector_store %arg10[%c0_71, %c0_72], %100 {strides = array<i32>} : memref<1x128xf32, #tpu.memory_space<vmem>>, vector<1x128xf32>,
    return
  }
  func.func @transform_0(%arg0: i32) -> (i32, i32, i32, i32) {
    %c0_i32 = arith.constant 0 : i32
    %c0_i32_0 = arith.constant 0 : i32
    %c0_i32_1 = arith.constant 0 : i32
    %c0_i32_2 = arith.constant 0 : i32
    return %arg0, %c0_i32, %c0_i32_0, %c0_i32_1 : i32, i32, i32, i32
  }
  func.func @transform_1(%arg0: i32) -> (i32, i32, i32, i32) {
    %c0_i32 = arith.constant 0 : i32
    %c0_i32_0 = arith.constant 0 : i32
    %c0_i32_1 = arith.constant 0 : i32
    %c0_i32_2 = arith.constant 0 : i32
    return %arg0, %c0_i32, %c0_i32_0, %c0_i32_1 : i32, i32, i32, i32
  }
  func.func @transform_2(%arg0: i32) -> (i32, i32, i32, i32) {
    %c0_i32 = arith.constant 0 : i32
    %c0_i32_0 = arith.constant 0 : i32
    %c0_i32_1 = arith.constant 0 : i32
    %c0_i32_2 = arith.constant 0 : i32
    return %arg0, %c0_i32, %c0_i32_0, %c0_i32_1 : i32, i32, i32, i32
  }
  func.func @transform_3(%arg0: i32) -> (i32, i32, i32, i32) {
    %c0_i32 = arith.constant 0 : i32
    %c0_i32_0 = arith.constant 0 : i32
    %c0_i32_1 = arith.constant 0 : i32
    %c0_i32_2 = arith.constant 0 : i32
    return %arg0, %c0_i32, %c0_i32_0, %c0_i32_1 : i32, i32, i32, i32
  }
  func.func @transform_4(%arg0: i32) -> (i32, i32, i32) {
    %c0_i32 = arith.constant 0 : i32
    %c0_i32_0 = arith.constant 0 : i32
    %c0_i32_1 = arith.constant 0 : i32
    %c0_i32_2 = arith.constant 0 : i32
    return %c0_i32, %c0_i32_0, %c0_i32_1 : i32, i32, i32
  }
  func.func @transform_5(%arg0: i32) -> (i32, i32) {
    %c0_i32 = arith.constant 0 : i32
    %c0_i32_0 = arith.constant 0 : i32
    %c0_i32_1 = arith.constant 0 : i32
    return %c0_i32, %c0_i32_0 : i32, i32
  }
  func.func @transform_6(%arg0: i32) -> (i32, i32) {
    %c0_i32 = arith.constant 0 : i32
    %c0_i32_0 = arith.constant 0 : i32
    %c0_i32_1 = arith.constant 0 : i32
    return %c0_i32, %c0_i32_0 : i32, i32
  }
  func.func @transform_7(%arg0: i32) -> (i32, i32, i32, i32) {
    %c0_i32 = arith.constant 0 : i32
    %c0_i32_0 = arith.constant 0 : i32
    %c0_i32_1 = arith.constant 0 : i32
    %c0_i32_2 = arith.constant 0 : i32
    return %arg0, %c0_i32, %c0_i32_0, %c0_i32_1 : i32, i32, i32, i32
  }
  func.func @transform_8(%arg0: i32) -> (i32, i32) {
    %c0_i32 = arith.constant 0 : i32
    %c0_i32_0 = arith.constant 0 : i32
    %c0_i32_1 = arith.constant 0 : i32
    return %c0_i32, %c0_i32_0 : i32, i32
  }
  func.func @transform_9(%arg0: i32) -> (i32, i32) {
    %c0_i32 = arith.constant 0 : i32
    %c0_i32_0 = arith.constant 0 : i32
    %c0_i32_1 = arith.constant 0 : i32
    return %c0_i32, %c0_i32_0 : i32, i32
  }
}

</mosaic_0001>

<llo_original>
// kernel: tpu_custom_call.1
$region0: #{tpu_custom_call.1}
  #allocation0 [shape = 'u32[]', space=smem, size = 0x4, offset = 0x4, fixed_abs, tag = 'smem constant byte address 0x4 - core index']
  #allocation1 [shape = 'u32[144,128]{1,0:T(1,128)}', space=vmem, size = 0x12000, scoped, tag = 'internal scratch']
  #allocation2 [shape = 'f32[1,128]{1,0:T(1,128)}', space=vmem, size = 0x200, scoped, tag = 'scratch operand']
  #allocation3 [shape = 'f32[1,128]{1,0:T(1,128)}', space=vmem, size = 0x200, scoped, tag = 'scratch operand']
  %s0 = inlined_call_operand.vmem [shape: f32[2,8,8,4], index: 0, kind: input, shape index: {}]
  %s1 = inlined_call_operand.vmem [shape: f32[2,8,8,4], index: 1, kind: input, shape index: {}]
  %s2 = inlined_call_operand.vmem [shape: f32[2,8,8,4], index: 2, kind: input, shape index: {}]
  %s3 = inlined_call_operand.vmem [shape: f32[2,8,8,4], index: 3, kind: input, shape index: {}]
  %s4 = inlined_call_operand.vmem [shape: f32[9,4,128], index: 4, kind: input, shape index: {}]
  %s5 = inlined_call_operand.vmem [shape: f32[1,128], index: 5, kind: input, shape index: {}]
  %s6 = inlined_call_operand.vmem [shape: f32[1,128], index: 6, kind: input, shape index: {}]
  %s7 = inlined_call_operand.vmem [shape: f32[2,6,6,128], index: 7, kind: output, shape index: {0}]
  %s8 = inlined_call_operand.hbm [shape: f32[1,128], index: 8, kind: output, shape index: {1}]
  %s9 = inlined_call_operand.hbm [shape: f32[1,128], index: 9, kind: output, shape index: {2}]
  %10 = xla_tuple %s7, %s8, %s9
  %s11 = sld [smem:[#allocation0]]
  $region81: #{tpu_custom_call.1} parent=0
    _
  %s13 = ssub.s32 1, %s11
  %s14 = scalar_select 0, %s13, %s11
  $region1: #{tpu_custom_call.1} parent=0
    #allocation4 [shape = 'u8[512]{0}', space=vmem, size = 0x400, scoped, tag = 'output window, operand 1, single buffered']
    #allocation5 [shape = 's32[2]{0}', space=sflag, size = 0x8, scoped, tag = 'scoped memory for tpu_custom_call.1']
    #allocation6 [shape = 'u8[512]{0}', space=vmem, size = 0x400, scoped, tag = 'output window, operand 2, single buffered']
    #allocation7 [shape = 's32[1]{0}', space=sflag, size = 0x4, scoped, tag = 'scoped memory for tpu_custom_call.1']
    %15 = vsyncpa [#allocation5], 0
    %16 = vsyncpa [#allocation7], 0
    loop: start=0, step=1, limit=4
    $region2: #{tpu_custom_call.1} parent=1 // loop_pre_header
      _
    $region3: #{tpu_custom_call.1} parent=1 // loop_header
      %s18 = sphi 0, %s22
      %p19 = scmp.ge.s32.totalorder %s18, 4
      %s28 = sphi 0, %s30
      %s31 = sphi 0, %s28
      %s32 = sphi 0, %s31
      %s48 = sphi 0, %s32
      %s54 = sphi 0, %s56
      %s57 = sphi 0, %s54
      %s58 = sphi 0, %s57
      %s74 = sphi 0, %s58
      %s80 = sphi 0, %s82
      %s83 = sphi 0, %s80
      %s84 = sphi 0, %s83
      %s100 = sphi 0, %s84
      %s106 = sphi 0, %s108
      %s109 = sphi 0, %s106
      %s110 = sphi 0, %s109
      %s126 = sphi 0, %s110
      %s130 = sphi 0, %s130
      %s132 = sphi 0, %s130
      %s133 = sphi 0, %s132
      %s147 = sphi 0, %s133
      %s151 = sphi 0, %s151
      %s153 = sphi 0, %s151
      %s154 = sphi 0, %s153
      %s168 = sphi 0, %s154
      %s172 = sphi 0, %s172
      %s174 = sphi 0, %s172
      %s175 = sphi 0, %s174
      %s189 = sphi 0, %s175
      %s195 = sphi 0, %s197
      %s198 = sphi 0, %s195
      %s199 = sphi 0, %s198
      %s215 = sphi 0, %s199
      %s219 = sphi 0, %s219
      %s221 = sphi 0, %s219
      %s222 = sphi 0, %s221
      %s236 = sphi 0, %s222
      %s240 = sphi 0, %s240
      %s242 = sphi 0, %s240
      %s243 = sphi 0, %s242
      %s257 = sphi 0, %s243
    $region4: #{tpu_custom_call.1} parent=1 // loop_header_branch
      %21 = sbr.rel (%p19) target = $region8
    $region5: #{tpu_custom_call.1} parent=1 // loop_body
      %s23 = ssub.s32 %s18, 1
      %s24 = ssub.s32 %s18, 2
      %s25 = sadd.s32 %s18, 1
      %s26 = ssub.s32 %s18, %s25
      %p27 = scmp.eq.s32.totalorder %s26, 0
      %s29 = sadd.s32 %s28, 1
      %s30 = scalar_select %p27, %s28, %s29
      %p33 = pneg %p27
      %p34 = scmp.eq.s32.totalorder %s18, 1
      %p35 = por %p33, %p34
      %p36 = scmp.ne.s32.totalorder %s28, %s31
      %p37 = scmp.eq.s32.totalorder %s18, 0
      %p38 = por %p36, %p37
      %p39 = scmp.ne.s32.totalorder %s28, %s31
      %p40 = scmp.eq.s32.totalorder %s23, 1
      %p41 = por %p39, %p40
      %p42 = scmp.ne.s32.totalorder %s31, %s32
      %p43 = scmp.eq.s32.totalorder %s23, 0
      %p44 = por %p42, %p43
      %p45 = scmp.ne.s32.totalorder %s31, %s32
      %p46 = scmp.eq.s32.totalorder %s24, 1
      %p47 = por %p45, %p46
      %p49 = scmp.ne.s32.totalorder %s32, %s48
      %p50 = scmp.eq.s32.totalorder %s24, 0
      %p51 = por %p49, %p50
      %s52 = ssub.s32 %s18, %s25
      %p53 = scmp.eq.s32.totalorder %s52, 0
      %s55 = sadd.s32 %s54, 1
      %s56 = scalar_select %p53, %s54, %s55
      %p59 = pneg %p53
      %p60 = scmp.eq.s32.totalorder %s18, 1
      %p61 = por %p59, %p60
      %p62 = scmp.ne.s32.totalorder %s54, %s57
      %p63 = scmp.eq.s32.totalorder %s18, 0
      %p64 = por %p62, %p63
      %p65 = scmp.ne.s32.totalorder %s54, %s57
      %p66 = scmp.eq.s32.totalorder %s23, 1
      %p67 = por %p65, %p66
      %p68 = scmp.ne.s32.totalorder %s57, %s58
      %p69 = scmp.eq.s32.totalorder %s23, 0
      %p70 = por %p68, %p69
      %p71 = scmp.ne.s32.totalorder %s57, %s58
      %p72 = scmp.eq.s32.totalorder %s24, 1
      %p73 = por %p71, %p72
      %p75 = scmp.ne.s32.totalorder %s58, %s74
      %p76 = scmp.eq.s32.totalorder %s24, 0
      %p77 = por %p75, %p76
      %s78 = ssub.s32 %s18, %s25
      %p79 = scmp.eq.s32.totalorder %s78, 0
      %s81 = sadd.s32 %s80, 1
      %s82 = scalar_select %p79, %s80, %s81
      %p85 = pneg %p79
      %p86 = scmp.eq.s32.totalorder %s18, 1
      %p87 = por %p85, %p86
      %p88 = scmp.ne.s32.totalorder %s80, %s83
      %p89 = scmp.eq.s32.totalorder %s18, 0
      %p90 = por %p88, %p89
      %p91 = scmp.ne.s32.totalorder %s80, %s83
      %p92 = scmp.eq.s32.totalorder %s23, 1
      %p93 = por %p91, %p92
      %p94 = scmp.ne.s32.totalorder %s83, %s84
      %p95 = scmp.eq.s32.totalorder %s23, 0
      %p96 = por %p94, %p95
      %p97 = scmp.ne.s32.totalorder %s83, %s84
      %p98 = scmp.eq.s32.totalorder %s24, 1
      %p99 = por %p97, %p98
      %p101 = scmp.ne.s32.totalorder %s84, %s100
      %p102 = scmp.eq.s32.totalorder %s24, 0
      %p103 = por %p101, %p102
      %s104 = ssub.s32 %s18, %s25
      %p105 = scmp.eq.s32.totalorder %s104, 0
      %s107 = sadd.s32 %s106, 1
      %s108 = scalar_select %p105, %s106, %s107
      %p111 = pneg %p105
      %p112 = scmp.eq.s32.totalorder %s18, 1
      %p113 = por %p111, %p112
      %p114 = scmp.ne.s32.totalorder %s106, %s109
      %p115 = scmp.eq.s32.totalorder %s18, 0
      %p116 = por %p114, %p115
      %p117 = scmp.ne.s32.totalorder %s106, %s109
      %p118 = scmp.eq.s32.totalorder %s23, 1
      %p119 = por %p117, %p118
      %p120 = scmp.ne.s32.totalorder %s109, %s110
      %p121 = scmp.eq.s32.totalorder %s23, 0
      %p122 = por %p120, %p121
      %p123 = scmp.ne.s32.totalorder %s109, %s110
      %p124 = scmp.eq.s32.totalorder %s24, 1
      %p125 = por %p123, %p124
      %p127 = scmp.ne.s32.totalorder %s110, %s126
      %p128 = scmp.eq.s32.totalorder %s24, 0
      %p129 = por %p127, %p128
      %s131 = sadd.s32 %s130, 1
      %p134 = scmp.eq.s32.totalorder %s18, 1
      %p135 = scmp.ne.s32.totalorder %s130, %s132
      %p136 = scmp.eq.s32.totalorder %s18, 0
      %p137 = por %p135, %p136
      %p138 = scmp.ne.s32.totalorder %s130, %s132
      %p139 = scmp.eq.s32.totalorder %s23, 1
      %p140 = por %p138, %p139
      %p141 = scmp.ne.s32.totalorder %s132, %s133
      %p142 = scmp.eq.s32.totalorder %s23, 0
      %p143 = por %p141, %p142
      %p144 = scmp.ne.s32.totalorder %s132, %s133
      %p145 = scmp.eq.s32.totalorder %s24, 1
      %p146 = por %p144, %p145
      %p148 = scmp.ne.s32.totalorder %s133, %s147
      %p149 = scmp.eq.s32.totalorder %s24, 0
      %p150 = por %p148, %p149
      %s152 = sadd.s32 %s151, 1
      %p155 = scmp.eq.s32.totalorder %s18, 1
      %p156 = scmp.ne.s32.totalorder %s151, %s153
      %p157 = scmp.eq.s32.totalorder %s18, 0
      %p158 = por %p156, %p157
      %p159 = scmp.ne.s32.totalorder %s151, %s153
      %p160 = scmp.eq.s32.totalorder %s23, 1
      %p161 = por %p159, %p160
      %p162 = scmp.ne.s32.totalorder %s153, %s154
      %p163 = scmp.eq.s32.totalorder %s23, 0
      %p164 = por %p162, %p163
      %p165 = scmp.ne.s32.totalorder %s153, %s154
      %p166 = scmp.eq.s32.totalorder %s24, 1
      %p167 = por %p165, %p166
      %p169 = scmp.ne.s32.totalorder %s154, %s168
      %p170 = scmp.eq.s32.totalorder %s24, 0
      %p171 = por %p169, %p170
      %s173 = sadd.s32 %s172, 1
      %p176 = scmp.eq.s32.totalorder %s18, 1
      %p177 = scmp.ne.s32.totalorder %s172, %s174
      %p178 = scmp.eq.s32.totalorder %s18, 0
      %p179 = por %p177, %p178
      %p180 = scmp.ne.s32.totalorder %s172, %s174
      %p181 = scmp.eq.s32.totalorder %s23, 1
      %p182 = por %p180, %p181
      %p183 = scmp.ne.s32.totalorder %s174, %s175
      %p184 = scmp.eq.s32.totalorder %s23, 0
      %p185 = por %p183, %p184
      %p186 = scmp.ne.s32.totalorder %s174, %s175
      %p187 = scmp.eq.s32.totalorder %s24, 1
      %p188 = por %p186, %p187
      %p190 = scmp.ne.s32.totalorder %s175, %s189
      %p191 = scmp.eq.s32.totalorder %s24, 0
      %p192 = por %p190, %p191
      %s193 = ssub.s32 %s18, %s25
      %p194 = scmp.eq.s32.totalorder %s193, 0
      %s196 = sadd.s32 %s195, 1
      %s197 = scalar_select %p194, %s195, %s196
      %p200 = pneg %p194
      %p201 = scmp.eq.s32.totalorder %s18, 1
      %p202 = por %p200, %p201
      %p203 = scmp.ne.s32.totalorder %s195, %s198
      %p204 = scmp.eq.s32.totalorder %s18, 0
      %p205 = por %p203, %p204
      %p206 = scmp.ne.s32.totalorder %s195, %s198
      %p207 = scmp.eq.s32.totalorder %s23, 1
      %p208 = por %p206, %p207
      %p209 = scmp.ne.s32.totalorder %s198, %s199
      %p210 = scmp.eq.s32.totalorder %s23, 0
      %p211 = por %p209, %p210
      %p212 = scmp.ne.s32.totalorder %s198, %s199
      %p213 = scmp.eq.s32.totalorder %s24, 1
      %p214 = por %p212, %p213
      %p216 = scmp.ne.s32.totalorder %s199, %s215
      %p217 = scmp.eq.s32.totalorder %s24, 0
      %p218 = por %p216, %p217
      %s220 = sadd.s32 %s219, 1
      %p223 = scmp.eq.s32.totalorder %s18, 1
      %p224 = scmp.ne.s32.totalorder %s219, %s221
      %p225 = scmp.eq.s32.totalorder %s18, 0
      %p226 = por %p224, %p225
      %p227 = scmp.ne.s32.totalorder %s219, %s221
      %p228 = scmp.eq.s32.totalorder %s23, 1
      %p229 = por %p227, %p228
      %p230 = scmp.ne.s32.totalorder %s221, %s222
      %p231 = scmp.eq.s32.totalorder %s23, 0
      %p232 = por %p230, %p231
      %p233 = scmp.ne.s32.totalorder %s221, %s222
      %p234 = scmp.eq.s32.totalorder %s24, 1
      %p235 = por %p233, %p234
      %p237 = scmp.ne.s32.totalorder %s222, %s236
      %p238 = scmp.eq.s32.totalorder %s24, 0
      %p239 = por %p237, %p238
      %s241 = sadd.s32 %s240, 1
      %p244 = scmp.eq.s32.totalorder %s18, 1
      %p245 = scmp.ne.s32.totalorder %s240, %s242
      %p246 = scmp.eq.s32.totalorder %s18, 0
      %p247 = por %p245, %p246
      %p248 = scmp.ne.s32.totalorder %s240, %s242
      %p249 = scmp.eq.s32.totalorder %s23, 1
      %p250 = por %p248, %p249
      %p251 = scmp.ne.s32.totalorder %s242, %s243
      %p252 = scmp.eq.s32.totalorder %s23, 0
      %p253 = por %p251, %p252
      %p254 = scmp.ne.s32.totalorder %s242, %s243
      %p255 = scmp.eq.s32.totalorder %s24, 1
      %p256 = por %p254, %p255
      %p258 = scmp.ne.s32.totalorder %s243, %s257
      %p259 = scmp.eq.s32.totalorder %s24, 0
      %p260 = por %p258, %p259
      %p261 = scmp.le.s32.totalorder 1, %s18
      %p262 = scmp.lt.s32.totalorder %s18, 3
      %p263 = pnand %p261, %p262
      %p264 = pneg %p263
      // Predicated region
      $region9: #{tpu_custom_call.1} parent=5 // pred_check
        _
      $region10: #{tpu_custom_call.1} parent=5 // pred_check_branch
        %266 = sbr.rel (%p263) target = $region12
      $region11: #{tpu_custom_call.1} parent=5 // pred_region
        %s267 = ssub.s32 %s18, 1
        // Predicated region
        $region13: #{tpu_custom_call.1} parent=11 // pred_check
          %p268 = pneg %p143
        $region14: #{tpu_custom_call.1} parent=11 // pred_check_branch
          %270 = sbr.rel (%p268) target = $region16
        $region15: #{tpu_custom_call.1} parent=11 // pred_region
          _
        $region16: #{tpu_custom_call.1} parent=11 // pred_fallthru
          _
        // Predicated region
        $region17: #{tpu_custom_call.1} parent=11 // pred_check
          %p271 = pneg %p164
        $region18: #{tpu_custom_call.1} parent=11 // pred_check_branch
          %273 = sbr.rel (%p271) target = $region20
        $region19: #{tpu_custom_call.1} parent=11 // pred_region
          _
        $region20: #{tpu_custom_call.1} parent=11 // pred_fallthru
          _
        // Predicated region
        $region21: #{tpu_custom_call.1} parent=11 // pred_check
          %p274 = pneg %p185
        $region22: #{tpu_custom_call.1} parent=11 // pred_check_branch
          %276 = sbr.rel (%p274) target = $region24
        $region23: #{tpu_custom_call.1} parent=11 // pred_region
          _
        $region24: #{tpu_custom_call.1} parent=11 // pred_fallthru
          _
      $region12: #{tpu_custom_call.1} parent=5 // pred_fallthru
        _
      %p277 = scmp.lt.s32.totalorder %s18, 2
      // Predicated region
      $region25: #{tpu_custom_call.1} parent=5 // pred_check
        %p278 = pneg %p277
      $region26: #{tpu_custom_call.1} parent=5 // pred_check_branch
        %280 = sbr.rel (%p278) target = $region28
      $region27: #{tpu_custom_call.1} parent=5 // pred_region
        // Predicated region
        $region29: #{tpu_custom_call.1} parent=27 // pred_check
          %p281 = pneg %p38
        $region30: #{tpu_custom_call.1} parent=27 // pred_check_branch
          %283 = sbr.rel (%p281) target = $region32
        $region31: #{tpu_custom_call.1} parent=27 // pred_region
          %p284 = scmp.lt.s32.totalorder %s18, 1
          %s285 = scalar_select %p284, %s18, 1
          %s286 = smul.addr %s285, 8
          %s287 = smul.addr %s286, 8
          %s288 = scalar_lea.vmem %s0, %s287
        $region32: #{tpu_custom_call.1} parent=27 // pred_fallthru
          _
        // Predicated region
        $region33: #{tpu_custom_call.1} parent=27 // pred_check
          %p289 = pneg %p64
        $region34: #{tpu_custom_call.1} parent=27 // pred_check_branch
          %291 = sbr.rel (%p289) target = $region36
        $region35: #{tpu_custom_call.1} parent=27 // pred_region
          %p292 = scmp.lt.s32.totalorder %s18, 1
          %s293 = scalar_select %p292, %s18, 1
          %s294 = smul.addr %s293, 8
          %s295 = smul.addr %s294, 8
          %s296 = scalar_lea.vmem %s1, %s295
        $region36: #{tpu_custom_call.1} parent=27 // pred_fallthru
          _
        // Predicated region
        $region37: #{tpu_custom_call.1} parent=27 // pred_check
          %p297 = pneg %p90
        $region38: #{tpu_custom_call.1} parent=27 // pred_check_branch
          %299 = sbr.rel (%p297) target = $region40
        $region39: #{tpu_custom_call.1} parent=27 // pred_region
          %p300 = scmp.lt.s32.totalorder %s18, 1
          %s301 = scalar_select %p300, %s18, 1
          %s302 = smul.addr %s301, 8
          %s303 = smul.addr %s302, 8
          %s304 = scalar_lea.vmem %s2, %s303
        $region40: #{tpu_custom_call.1} parent=27 // pred_fallthru
          _
        // Predicated region
        $region41: #{tpu_custom_call.1} parent=27 // pred_check
          %p305 = pneg %p116
        $region42: #{tpu_custom_call.1} parent=27 // pred_check_branch
          %307 = sbr.rel (%p305) target = $region44
        $region43: #{tpu_custom_call.1} parent=27 // pred_region
          %p308 = scmp.lt.s32.totalorder %s18, 1
          %s309 = scalar_select %p308, %s18, 1
          %s310 = smul.addr %s309, 8
          %s311 = smul.addr %s310, 8
          %s312 = scalar_lea.vmem %s3, %s311
        $region44: #{tpu_custom_call.1} parent=27 // pred_fallthru
          _
      $region28: #{tpu_custom_call.1} parent=5 // pred_fallthru
        _
      %p313 = scmp.le.s32.totalorder 1, %s18
      %p314 = scmp.lt.s32.totalorder %s18, 3
      %p315 = pnand %p313, %p314
      %p316 = pneg %p315
      // Predicated region
      $region45: #{tpu_custom_call.1} parent=5 // pred_check
        _
      $region46: #{tpu_custom_call.1} parent=5 // pred_check_branch
        %318 = sbr.rel (%p315) target = $region48
      $region47: #{tpu_custom_call.1} parent=5 // pred_region
        %s319 = ssub.s32 %s18, 1
        %p320 = scmp.lt.s32.totalorder %s23, 1
        %s321 = scalar_select %p320, %s23, 1
        %s322 = smul.addr %s321, 8
        %s323 = smul.addr %s322, 8
        %s324 = scalar_lea.vmem %s0, %s323
        %p325 = pneg %p44
        %p326 = pneg %p41
        %p327 = scmp.lt.s32.totalorder %s23, 1
        %s328 = scalar_select %p327, %s23, 1
        %s329 = smul.addr %s328, 8
        %s330 = smul.addr %s329, 8
        %s331 = scalar_lea.vmem %s1, %s330
        %p332 = pneg %p70
        %p333 = pneg %p67
        %p334 = scmp.lt.s32.totalorder %s23, 1
        %s335 = scalar_select %p334, %s23, 1
        %s336 = smul.addr %s335, 8
        %s337 = smul.addr %s336, 8
        %s338 = scalar_lea.vmem %s2, %s337
        %p339 = pneg %p96
        %p340 = pneg %p93
        %p341 = scmp.lt.s32.totalorder %s23, 1
        %s342 = scalar_select %p341, %s23, 1
        %s343 = smul.addr %s342, 8
        %s344 = smul.addr %s343, 8
        %s345 = scalar_lea.vmem %s3, %s344
        %p346 = pneg %p122
        %p347 = pneg %p119
        %p348 = pneg %p143
        %p349 = pneg %p140
        %p350 = pneg %p164
        %p351 = pneg %p161
        %p352 = pneg %p185
        %p353 = pneg %p182
        %p354 = pneg %p211
        %p355 = pneg %p208
        %p356 = scmp.lt.s32.totalorder %s23, 1
        %s357 = scalar_select %p356, %s23, 1
        %s358 = smul.addr %s357, 6
        %s359 = smul.addr %s358, 8
        %s360 = scalar_lea.vmem %s7, %s359
        %p361 = pneg %p232
        %p362 = pneg %p229
        %p363 = pneg %p253
        %p364 = pneg %p250
        %p365 = scmp.lt.s32.totalorder %s23, 1
        %s366 = scalar_select %p365, %s23, 1
        %s367 = smul.addr %s366, 8
        %s368 = smul.addr %s367, 8
        %s369 = scalar_lea.vmem %s0, %s368
        %p370 = scmp.lt.s32.totalorder %s23, 1
        %s371 = scalar_select %p370, %s23, 1
        %s372 = smul.addr %s371, 8
        %s373 = smul.addr %s372, 8
        %s374 = scalar_lea.vmem %s1, %s373
        %p375 = scmp.lt.s32.totalorder %s23, 1
        %s376 = scalar_select %p375, %s23, 1
        %s377 = smul.addr %s376, 8
        %s378 = smul.addr %s377, 8
        %s379 = scalar_lea.vmem %s2, %s378
        %p380 = scmp.lt.s32.totalorder %s23, 1
        %s381 = scalar_select %p380, %s23, 1
        %s382 = smul.addr %s381, 8
        %s383 = smul.addr %s382, 8
        %s384 = scalar_lea.vmem %s3, %s383
        %p385 = scmp.lt.s32.totalorder %s23, 1
        %s386 = scalar_select %p385, %s23, 1
        %s387 = smul.addr %s386, 6
        %s388 = smul.addr %s387, 8
        %s389 = scalar_lea.vmem %s7, %s388
        %p390 = scmp.eq.s32.totalorder %s23, 0
        // Predicated region
        $region49: #{tpu_custom_call.1} parent=47 // pred_check
          %p391 = pneg %p390
        $region50: #{tpu_custom_call.1} parent=47 // pred_check_branch
          %393 = sbr.rel (%p391) target = $region52
        $region51: #{tpu_custom_call.1} parent=47 // pred_region
          %394 = vst [vmem:[#allocation2] sm:$0x1] 0.0
          %395 = vst [vmem:[#allocation3] sm:$0x1] 0.0
        $region52: #{tpu_custom_call.1} parent=47 // pred_fallthru
          _
        %v396 = vld [vmem:[%s369] sm:$0xff]
        %v397 = vld [vmem:[%s369 + $0x8] sm:$0xff]
        %v398 = vld [vmem:[%s369 + $0x10] sm:$0xff]
        %v399 = vld [vmem:[%s369 + $0x18] sm:$0xff]
        %v400 = vld [vmem:[%s369 + $0x20] sm:$0xff]
        %v401 = vld [vmem:[%s369 + $0x28] sm:$0xff]
        %v402 = vld [vmem:[%s369 + $0x30] sm:$0xff]
        %v403 = vld [vmem:[%s369 + $0x38] sm:$0xff]
        %v404 = vld [vmem:[%s374] sm:$0xff]
        %v405 = vld [vmem:[%s374 + $0x8] sm:$0xff]
        %v406 = vld [vmem:[%s374 + $0x10] sm:$0xff]
        %v407 = vld [vmem:[%s374 + $0x18] sm:$0xff]
        %v408 = vld [vmem:[%s374 + $0x20] sm:$0xff]
        %v409 = vld [vmem:[%s374 + $0x28] sm:$0xff]
        %v410 = vld [vmem:[%s374 + $0x30] sm:$0xff]
        %v411 = vld [vmem:[%s374 + $0x38] sm:$0xff]
        %v412 = vmax.f32 %v396, %v404
        %v413 = vmax.f32 %v397, %v405
        %v414 = vmax.f32 %v398, %v406
        %v415 = vmax.f32 %v399, %v407
        %v416 = vmax.f32 %v400, %v408
        %v417 = vmax.f32 %v401, %v409
        %v418 = vmax.f32 %v402, %v410
        %v419 = vmax.f32 %v403, %v411
        %v420 = vld [vmem:[%s379] sm:$0xff]
        %v421 = vld [vmem:[%s379 + $0x8] sm:$0xff]
        %v422 = vld [vmem:[%s379 + $0x10] sm:$0xff]
        %v423 = vld [vmem:[%s379 + $0x18] sm:$0xff]
        %v424 = vld [vmem:[%s379 + $0x20] sm:$0xff]
        %v425 = vld [vmem:[%s379 + $0x28] sm:$0xff]
        %v426 = vld [vmem:[%s379 + $0x30] sm:$0xff]
        %v427 = vld [vmem:[%s379 + $0x38] sm:$0xff]
        %v428 = vld [vmem:[%s384] sm:$0xff]
        %v429 = vld [vmem:[%s384 + $0x8] sm:$0xff]
        %v430 = vld [vmem:[%s384 + $0x10] sm:$0xff]
        %v431 = vld [vmem:[%s384 + $0x18] sm:$0xff]
        %v432 = vld [vmem:[%s384 + $0x20] sm:$0xff]
        %v433 = vld [vmem:[%s384 + $0x28] sm:$0xff]
        %v434 = vld [vmem:[%s384 + $0x30] sm:$0xff]
        %v435 = vld [vmem:[%s384 + $0x38] sm:$0xff]
        %v436 = vmax.f32 %v420, %v428
        %v437 = vmax.f32 %v421, %v429
        %v438 = vmax.f32 %v422, %v430
        %v439 = vmax.f32 %v423, %v431
        %v440 = vmax.f32 %v424, %v432
        %v441 = vmax.f32 %v425, %v433
        %v442 = vmax.f32 %v426, %v434
        %v443 = vmax.f32 %v427, %v435
        %v444 = vmax.f32 %v412, %v436
        %v445 = vmax.f32 %v413, %v437
        %v446 = vmax.f32 %v414, %v438
        %v447 = vmax.f32 %v415, %v439
        %v448 = vmax.f32 %v416, %v440
        %v449 = vmax.f32 %v417, %v441
        %v450 = vmax.f32 %v418, %v442
        %v451 = vmax.f32 %v419, %v443
        %v458 = vcombine.high %v444, %v444
        %v460 = vunpack.c.l.s4 1983009808
        %v461 = vunpack.c.0.s8 %v460
        %v462 = vlaneseq
        %v463 = vshrl.u32 %v462, 7
        %v464 = vsub.s32 %v461, %v463
        %v465 = vrot.slane %v444, %v464
        %v467 = vunpack.c.l.s4 1983009808
        %v468 = vunpack.c.0.s8 %v467
        %v469 = vlaneseq
        %v470 = vshrl.u32 %v469, 7
        %v471 = vsub.s32 %v468, %v470
        %v472 = vrot.slane %v458, %v471
        %v473 = vcombine.high %v465, %v465
        %v474 = vcombine.high %v445, %v445
        %v476 = vunpack.c.l.s4 1983009808
        %v477 = vunpack.c.0.s8 %v476
        %v478 = vlaneseq
        %v479 = vshrl.u32 %v478, 7
        %v480 = vsub.s32 %v477, %v479
        %v481 = vrot.slane %v445, %v480
        %v483 = vunpack.c.l.s4 1983009808
        %v484 = vunpack.c.0.s8 %v483
        %v485 = vlaneseq
        %v486 = vshrl.u32 %v485, 7
        %v487 = vsub.s32 %v484, %v486
        %v488 = vrot.slane %v474, %v487
        %v489 = vcombine.high %v481, %v481
        %v490 = vcombine.high %v446, %v446
        %v492 = vunpack.c.l.s4 1983009808
        %v493 = vunpack.c.0.s8 %v492
        %v494 = vlaneseq
        %v495 = vshrl.u32 %v494, 7
        %v496 = vsub.s32 %v493, %v495
        %v497 = vrot.slane %v446, %v496
        %v499 = vunpack.c.l.s4 1983009808
        %v500 = vunpack.c.0.s8 %v499
        %v501 = vlaneseq
        %v502 = vshrl.u32 %v501, 7
        %v503 = vsub.s32 %v500, %v502
        %v504 = vrot.slane %v490, %v503
        %v505 = vcombine.high %v497, %v497
        %v506 = vcombine.high %v447, %v447
        %v508 = vunpack.c.l.s4 1983009808
        %v509 = vunpack.c.0.s8 %v508
        %v510 = vlaneseq
        %v511 = vshrl.u32 %v510, 7
        %v512 = vsub.s32 %v509, %v511
        %v513 = vrot.slane %v447, %v512
        %v515 = vunpack.c.l.s4 1983009808
        %v516 = vunpack.c.0.s8 %v515
        %v517 = vlaneseq
        %v518 = vshrl.u32 %v517, 7
        %v519 = vsub.s32 %v516, %v518
        %v520 = vrot.slane %v506, %v519
        %v521 = vcombine.high %v513, %v513
        %v522 = vcombine.high %v448, %v448
        %v524 = vunpack.c.l.s4 1983009808
        %v525 = vunpack.c.0.s8 %v524
        %v526 = vlaneseq
        %v527 = vshrl.u32 %v526, 7
        %v528 = vsub.s32 %v525, %v527
        %v529 = vrot.slane %v448, %v528
        %v531 = vunpack.c.l.s4 1983009808
        %v532 = vunpack.c.0.s8 %v531
        %v533 = vlaneseq
        %v534 = vshrl.u32 %v533, 7
        %v535 = vsub.s32 %v532, %v534
        %v536 = vrot.slane %v522, %v535
        %v537 = vcombine.high %v529, %v529
        %v538 = vcombine.high %v449, %v449
        %v540 = vunpack.c.l.s4 1983009808
        %v541 = vunpack.c.0.s8 %v540
        %v542 = vlaneseq
        %v543 = vshrl.u32 %v542, 7
        %v544 = vsub.s32 %v541, %v543
        %v545 = vrot.slane %v449, %v544
        %v547 = vunpack.c.l.s4 1983009808
        %v548 = vunpack.c.0.s8 %v547
        %v549 = vlaneseq
        %v550 = vshrl.u32 %v549, 7
        %v551 = vsub.s32 %v548, %v550
        %v552 = vrot.slane %v538, %v551
        %v553 = vcombine.high %v545, %v545
        %v554 = vld [vmem:[%s4] sm:$0xf]
        %v555 = vcombine.high %v472, %v472
        %v556 = vcombine.high %v488, %v488
        %v557 = vcombine.high %v504, %v504
        %v558 = vcombine.high %v520, %v520
        %v559 = vcombine.high %v536, %v536
        %v560 = vcombine.high %v552, %v552
        %vm561 = vcmask 1040384
        %vm562 = vcmask 1042434
        %vm563 = vmor %vm561, %vm562
        %vm564 = vcmask 1044484
        %vm565 = vmor %vm563, %vm564
        %vm566 = vcmask 1046534
        %vm567 = vmor %vm565, %vm566
        %v568 = vrot.slane %v465, 7
        %v569 = vrot.slane %v568, 2
        %v570 = vrot.slane %v473, 7
        %v571 = vsel %vm567, %v569, %v570
        %v572 = vrot.slane %v570, 2
        %v573 = vrot.slane %v472, 7
        %v574 = vsel %vm567, %v572, %v573
        %v575 = vrot.slane %v573, 2
        %v576 = vrot.slane %v555, 7
        %v577 = vsel %vm567, %v575, %v576
        %v578 = vrot.slane %v481, 7
        %v579 = vrot.slane %v578, 2
        %v580 = vrot.slane %v489, 7
        %v581 = vsel %vm567, %v579, %v580
        %v582 = vrot.slane %v580, 2
        %v583 = vrot.slane %v488, 7
        %v584 = vsel %vm567, %v582, %v583
        %v585 = vrot.slane %v583, 2
        %v586 = vrot.slane %v556, 7
        %v587 = vsel %vm567, %v585, %v586
        %v588 = vrot.slane %v497, 7
        %v589 = vrot.slane %v588, 2
        %v590 = vrot.slane %v505, 7
        %v591 = vsel %vm567, %v589, %v590
        %v592 = vrot.slane %v590, 2
        %v593 = vrot.slane %v504, 7
        %v594 = vsel %vm567, %v592, %v593
        %v595 = vrot.slane %v593, 2
        %v596 = vrot.slane %v557, 7
        %v597 = vsel %vm567, %v595, %v596
        %v598 = vrot.slane %v513, 7
        %v599 = vrot.slane %v598, 2
        %v600 = vrot.slane %v521, 7
        %v601 = vsel %vm567, %v599, %v600
        %v602 = vrot.slane %v600, 2
        %v603 = vrot.slane %v520, 7
        %v604 = vsel %vm567, %v602, %v603
        %v605 = vrot.slane %v603, 2
        %v606 = vrot.slane %v558, 7
        %v607 = vsel %vm567, %v605, %v606
        %v608 = vrot.slane %v529, 7
        %v609 = vrot.slane %v608, 2
        %v610 = vrot.slane %v537, 7
        %v611 = vsel %vm567, %v609, %v610
        %v612 = vrot.slane %v610, 2
        %v613 = vrot.slane %v536, 7
        %v614 = vsel %vm567, %v612, %v613
        %v615 = vrot.slane %v613, 2
        %v616 = vrot.slane %v559, 7
        %v617 = vsel %vm567, %v615, %v616
        %v618 = vrot.slane %v545, 7
        %v619 = vrot.slane %v618, 2
        %v620 = vrot.slane %v553, 7
        %v621 = vsel %vm567, %v619, %v620
        %v622 = vrot.slane %v620, 2
        %v623 = vrot.slane %v552, 7
        %v624 = vsel %vm567, %v622, %v623
        %v625 = vrot.slane %v623, 2
        %v626 = vrot.slane %v560, 7
        %v627 = vsel %vm567, %v625, %v626
        %s628 = scalar_lea.vmem %s4, 4
        %v629 = vld [vmem:[%s628] sm:$0xf]
        %v630 = vcombine.low %v571, %v574
        %v631 = vcombine.low %v577, %v581
        %v633 = vunpack.c.l.s4 1983009808
        %v634 = vunpack.c.0.s8 %v633
        %v635 = vlaneseq
        %v636 = vshrl.u32 %v635, 7
        %v637 = vsub.s32 %v634, %v636
        %v638 = vrot.slane %v630, %v637
        %v640 = vunpack.c.l.s4 1983009808
        %v641 = vunpack.c.0.s8 %v640
        %v642 = vlaneseq
        %v643 = vshrl.u32 %v642, 7
        %v644 = vsub.s32 %v641, %v643
        %v645 = vrot.slane %v631, %v644
        %v646 = vcombine.low %v638, %v645
        %v647 = vcombine.low %v584, %v587
        %v648 = vcombine.low %v591, %v594
        %v650 = vunpack.c.l.s4 1983009808
        %v651 = vunpack.c.0.s8 %v650
        %v652 = vlaneseq
        %v653 = vshrl.u32 %v652, 7
        %v654 = vsub.s32 %v651, %v653
        %v655 = vrot.slane %v647, %v654
        %v657 = vunpack.c.l.s4 1983009808
        %v658 = vunpack.c.0.s8 %v657
        %v659 = vlaneseq
        %v660 = vshrl.u32 %v659, 7
        %v661 = vsub.s32 %v658, %v660
        %v662 = vrot.slane %v648, %v661
        %v663 = vcombine.low %v655, %v662
        %v664 = vcombine.low %v597, %v601
        %v665 = vcombine.low %v604, %v607
        %v667 = vunpack.c.l.s4 1983009808
        %v668 = vunpack.c.0.s8 %v667
        %v669 = vlaneseq
        %v670 = vshrl.u32 %v669, 7
        %v671 = vsub.s32 %v668, %v670
        %v672 = vrot.slane %v664, %v671
        %v674 = vunpack.c.l.s4 1983009808
        %v675 = vunpack.c.0.s8 %v674
        %v676 = vlaneseq
        %v677 = vshrl.u32 %v676, 7
        %v678 = vsub.s32 %v675, %v677
        %v679 = vrot.slane %v665, %v678
        %v680 = vcombine.low %v672, %v679
        %v681 = vcombine.low %v611, %v614
        %v682 = vcombine.low %v617, %v621
        %v684 = vunpack.c.l.s4 1983009808
        %v685 = vunpack.c.0.s8 %v684
        %v686 = vlaneseq
        %v687 = vshrl.u32 %v686, 7
        %v688 = vsub.s32 %v685, %v687
        %v689 = vrot.slane %v681, %v688
        %v691 = vunpack.c.l.s4 1983009808
        %v692 = vunpack.c.0.s8 %v691
        %v693 = vlaneseq
        %v694 = vshrl.u32 %v693, 7
        %v695 = vsub.s32 %v692, %v694
        %v696 = vrot.slane %v682, %v695
        %v697 = vcombine.low %v689, %v696
        %v698 = vcombine.low %v624, %v627
        %v700 = vunpack.c.l.s4 1983009808
        %v701 = vunpack.c.0.s8 %v700
        %v702 = vlaneseq
        %v703 = vshrl.u32 %v702, 7
        %v704 = vsub.s32 %v701, %v703
        %v705 = vrot.slane %v698, %v704
        %vm706 = vcmask 31744
        %v707 = vsel %vm706, %v646, 0
        %v709 = vsel %vm706, %v663, 0
        %v711 = vsel %vm706, %v680, 0
        %v713 = vsel %vm706, %v697, 0
        %v715 = vsel %vm706, %v705, 0
        %vm717 = vcmask 1043456
        %v719 = vsel %vm717, %v629, 0
        %721 = vmatprep.subr.mxu0 0.0
        %722 = vmatpush1.msra.mxu0 %v719
        %723 = vmatprep.subr.mxu0 0.0
        %724 = vmatpush1.msra.mxu0 0.0
        %725 = vmatprep.subr.mxu0 0.0
        %726 = vmatpush1.msra.mxu0 0.0
        %727 = vmatprep.subr.mxu0 0.0
        %728 = vmatpush1.msra.mxu0 0.0
        %729 = vmatprep.subr.mxu0 0.0
        %730 = vmatpush1.msra.mxu0 0.0
        %731 = vmatprep.subr.mxu0 0.0
        %732 = vmatpush1.msra.mxu0 0.0
        %733 = vmatprep.subr.mxu0 0.0
        %734 = vmatpush1.msra.mxu0 0.0
        %735 = vmatprep.subr.mxu0 0.0
        %736 = vmatpush1.msra.mxu0 0.0
        %737 = vmatprep.subr.mxu0 0.0
        %738 = vmatpush1.msra.mxu0 0.0
        %739 = vmatprep.subr.mxu0 0.0
        %740 = vmatpush1.msra.mxu0 0.0
        %741 = vmatprep.subr.mxu0 0.0
        %742 = vmatpush1.msra.mxu0 0.0
        %743 = vmatprep.subr.mxu0 0.0
        %744 = vmatpush1.msra.mxu0 0.0
        %745 = vmatprep.subr.mxu0 0.0
        %746 = vmatpush1.msra.mxu0 0.0
        %747 = vmatprep.subr.mxu0 0.0
        %748 = vmatpush1.msra.mxu0 0.0
        %749 = vmatprep.subr.mxu0 0.0
        %750 = vmatpush1.msra.mxu0 0.0
        %751 = vmatprep.subr.mxu0 0.0
        %752 = vmatpush1.msra.mxu0 0.0
        %753 = vmatprep.subr.mxu0 0.0
        %754 = vmatpush1.msra.mxu0 0.0
        %755 = vmatprep.subr.mxu0 0.0
        %756 = vmatpush1.msra.mxu0 0.0
        %757 = vmatprep.subr.mxu0 0.0
        %758 = vmatpush1.msra.mxu0 0.0
        %759 = vmatprep.subr.mxu0 0.0
        %760 = vmatpush1.msra.mxu0 0.0
        %761 = vmatprep.subr.mxu0 0.0
        %762 = vmatpush1.msra.mxu0 0.0
        %763 = vmatprep.subr.mxu0 0.0
        %764 = vmatpush1.msra.mxu0 0.0
        %765 = vmatprep.subr.mxu0 0.0
        %766 = vmatpush1.msra.mxu0 0.0
        %767 = vmatprep.subr.mxu0 0.0
        %768 = vmatpush1.msra.mxu0 0.0
        %769 = vmatprep.subr.mxu0 0.0
        %770 = vmatpush1.msra.mxu0 0.0
        %771 = vmatprep.subr.mxu0 0.0
        %772 = vmatpush1.msra.mxu0 0.0
        %773 = vmatprep.subr.mxu0 0.0
        %774 = vmatpush1.msra.mxu0 0.0
        %775 = vmatprep.subr.mxu0 0.0
        %776 = vmatpush1.msra.mxu0 0.0
        %777 = vmatprep.subr.mxu0 0.0
        %778 = vmatpush1.msra.mxu0 0.0
        %779 = vmatprep.subr.mxu0 0.0
        %780 = vmatpush1.msra.mxu0 0.0
        %781 = vmatprep.subr.mxu0 0.0
        %782 = vmatpush1.msra.mxu0 0.0
        %783 = vmatprep.subr.mxu0 0.0
        %784 = vmatpush1.msra.mxu0 0.0
        %785 = vmatprep.mubr.f32.mxu0 0.0
        %786 = vmatmul.mubr.f32.gmra.mrb[0].mxu0 %v707
        %v787 = vpop.f32.mrb[0].mxu0
        %v788 = vadd.f32 0.0, %v787
        %v789 = vpop.f32.mrb[0].mxu0
        %790 = vmatprep.mubr.f32.mxu0 0.0
        %791 = vmatmul.mubr.f32.gmra.mrb[0].mxu0 %v709
        %v792 = vpop.f32.mrb[0].mxu0
        %v793 = vadd.f32 0.0, %v792
        %v794 = vpop.f32.mrb[0].mxu0
        %795 = vmatprep.mubr.f32.mxu0 0.0
        %796 = vmatmul.mubr.f32.gmra.mrb[0].mxu0 %v711
        %v797 = vpop.f32.mrb[0].mxu0
        %v798 = vadd.f32 0.0, %v797
        %v799 = vpop.f32.mrb[0].mxu0
        %800 = vmatprep.mubr.f32.mxu0 0.0
        %801 = vmatmul.mubr.f32.gmra.mrb[0].mxu0 %v713
        %v802 = vpop.f32.mrb[0].mxu0
        %v803 = vadd.f32 0.0, %v802
        %v804 = vpop.f32.mrb[0].mxu0
        %805 = vmatprep.mubr.f32.mxu0 0.0
        %806 = vmatmul.mubr.f32.gmra.mrb[0].mxu0 %v715
        %v807 = vpop.f32.mrb[0].mxu0
        %v808 = vadd.f32 0.0, %v807
        %v809 = vpop.f32.mrb[0].mxu0
        %810 = vdwg.mxu0
        %v811 = vcombine.low %v465, %v473
        %v812 = vcombine.low %v472, %v481
        %v814 = vunpack.c.l.s4 1983009808
        %v815 = vunpack.c.0.s8 %v814
        %v816 = vlaneseq
        %v817 = vshrl.u32 %v816, 7
        %v818 = vsub.s32 %v815, %v817
        %v819 = vrot.slane %v811, %v818
        %v821 = vunpack.c.l.s4 1983009808
        %v822 = vunpack.c.0.s8 %v821
        %v823 = vlaneseq
        %v824 = vshrl.u32 %v823, 7
        %v825 = vsub.s32 %v822, %v824
        %v826 = vrot.slane %v812, %v825
        %v827 = vcombine.low %v819, %v826
        %v828 = vcombine.low %v489, %v488
        %v829 = vcombine.low %v497, %v505
        %v831 = vunpack.c.l.s4 1983009808
        %v832 = vunpack.c.0.s8 %v831
        %v833 = vlaneseq
        %v834 = vshrl.u32 %v833, 7
        %v835 = vsub.s32 %v832, %v834
        %v836 = vrot.slane %v828, %v835
        %v838 = vunpack.c.l.s4 1983009808
        %v839 = vunpack.c.0.s8 %v838
        %v840 = vlaneseq
        %v841 = vshrl.u32 %v840, 7
        %v842 = vsub.s32 %v839, %v841
        %v843 = vrot.slane %v829, %v842
        %v844 = vcombine.low %v836, %v843
        %v845 = vcombine.low %v504, %v513
        %v846 = vcombine.low %v521, %v520
        %v848 = vunpack.c.l.s4 1983009808
        %v849 = vunpack.c.0.s8 %v848
        %v850 = vlaneseq
        %v851 = vshrl.u32 %v850, 7
        %v852 = vsub.s32 %v849, %v851
        %v853 = vrot.slane %v845, %v852
        %v855 = vunpack.c.l.s4 1983009808
        %v856 = vunpack.c.0.s8 %v855
        %v857 = vlaneseq
        %v858 = vshrl.u32 %v857, 7
        %v859 = vsub.s32 %v856, %v858
        %v860 = vrot.slane %v846, %v859
        %v861 = vcombine.low %v853, %v860
        %v862 = vcombine.low %v529, %v537
        %v863 = vcombine.low %v536, %v545
        %v865 = vunpack.c.l.s4 1983009808
        %v866 = vunpack.c.0.s8 %v865
        %v867 = vlaneseq
        %v868 = vshrl.u32 %v867, 7
        %v869 = vsub.s32 %v866, %v868
        %v870 = vrot.slane %v862, %v869
        %v872 = vunpack.c.l.s4 1983009808
        %v873 = vunpack.c.0.s8 %v872
        %v874 = vlaneseq
        %v875 = vshrl.u32 %v874, 7
        %v876 = vsub.s32 %v873, %v875
        %v877 = vrot.slane %v863, %v876
        %v878 = vcombine.low %v870, %v877
        %v879 = vcombine.low %v553, %v552
        %v881 = vunpack.c.l.s4 1983009808
        %v882 = vunpack.c.0.s8 %v881
        %v883 = vlaneseq
        %v884 = vshrl.u32 %v883, 7
        %v885 = vsub.s32 %v882, %v884
        %v886 = vrot.slane %v879, %v885
        %v887 = vsel %vm706, %v827, 0
        %v889 = vsel %vm706, %v844, 0
        %v891 = vsel %vm706, %v861, 0
        %v893 = vsel %vm706, %v878, 0
        %v895 = vsel %vm706, %v886, 0
        %v898 = vsel %vm717, %v554, 0
        %900 = vmatprep.subr.mxu0 0.0
        %901 = vmatpush1.msra.mxu0 %v898
        %902 = vmatprep.subr.mxu0 0.0
        %903 = vmatpush1.msra.mxu0 0.0
        %904 = vmatprep.subr.mxu0 0.0
        %905 = vmatpush1.msra.mxu0 0.0
        %906 = vmatprep.subr.mxu0 0.0
        %907 = vmatpush1.msra.mxu0 0.0
        %908 = vmatprep.subr.mxu0 0.0
        %909 = vmatpush1.msra.mxu0 0.0
        %910 = vmatprep.subr.mxu0 0.0
        %911 = vmatpush1.msra.mxu0 0.0
        %912 = vmatprep.subr.mxu0 0.0
        %913 = vmatpush1.msra.mxu0 0.0
        %914 = vmatprep.subr.mxu0 0.0
        %915 = vmatpush1.msra.mxu0 0.0
        %916 = vmatprep.subr.mxu0 0.0
        %917 = vmatpush1.msra.mxu0 0.0
        %918 = vmatprep.subr.mxu0 0.0
        %919 = vmatpush1.msra.mxu0 0.0
        %920 = vmatprep.subr.mxu0 0.0
        %921 = vmatpush1.msra.mxu0 0.0
        %922 = vmatprep.subr.mxu0 0.0
        %923 = vmatpush1.msra.mxu0 0.0
        %924 = vmatprep.subr.mxu0 0.0
        %925 = vmatpush1.msra.mxu0 0.0
        %926 = vmatprep.subr.mxu0 0.0
        %927 = vmatpush1.msra.mxu0 0.0
        %928 = vmatprep.subr.mxu0 0.0
        %929 = vmatpush1.msra.mxu0 0.0
        %930 = vmatprep.subr.mxu0 0.0
        %931 = vmatpush1.msra.mxu0 0.0
        %932 = vmatprep.subr.mxu0 0.0
        %933 = vmatpush1.msra.mxu0 0.0
        %934 = vmatprep.subr.mxu0 0.0
        %935 = vmatpush1.msra.mxu0 0.0
        %936 = vmatprep.subr.mxu0 0.0
        %937 = vmatpush1.msra.mxu0 0.0
        %938 = vmatprep.subr.mxu0 0.0
        %939 = vmatpush1.msra.mxu0 0.0
        %940 = vmatprep.subr.mxu0 0.0
        %941 = vmatpush1.msra.mxu0 0.0
        %942 = vmatprep.subr.mxu0 0.0
        %943 = vmatpush1.msra.mxu0 0.0
        %944 = vmatprep.subr.mxu0 0.0
        %945 = vmatpush1.msra.mxu0 0.0
        %946 = vmatprep.subr.mxu0 0.0
        %947 = vmatpush1.msra.mxu0 0.0
        %948 = vmatprep.subr.mxu0 0.0
        %949 = vmatpush1.msra.mxu0 0.0
        %950 = vmatprep.subr.mxu0 0.0
        %951 = vmatpush1.msra.mxu0 0.0
        %952 = vmatprep.subr.mxu0 0.0
        %953 = vmatpush1.msra.mxu0 0.0
        %954 = vmatprep.subr.mxu0 0.0
        %955 = vmatpush1.msra.mxu0 0.0
        %956 = vmatprep.subr.mxu0 0.0
        %957 = vmatpush1.msra.mxu0 0.0
        %958 = vmatprep.subr.mxu0 0.0
        %959 = vmatpush1.msra.mxu0 0.0
        %960 = vmatprep.subr.mxu0 0.0
        %961 = vmatpush1.msra.mxu0 0.0
        %962 = vmatprep.subr.mxu0 0.0
        %963 = vmatpush1.msra.mxu0 0.0
        %964 = vmatprep.mubr.f32.mxu0 0.0
        %965 = vmatmul.mubr.f32.gmra.mrb[0].mxu0 %v887
        %v966 = vpop.f32.mrb[0].mxu0
        %v967 = vadd.f32 %v788, %v966
        %v968 = vpop.f32.mrb[0].mxu0
        %969 = vmatprep.mubr.f32.mxu0 0.0
        %970 = vmatmul.mubr.f32.gmra.mrb[0].mxu0 %v889
        %v971 = vpop.f32.mrb[0].mxu0
        %v972 = vadd.f32 %v793, %v971
        %v973 = vpop.f32.mrb[0].mxu0
        %974 = vmatprep.mubr.f32.mxu0 0.0
        %975 = vmatmul.mubr.f32.gmra.mrb[0].mxu0 %v891
        %v976 = vpop.f32.mrb[0].mxu0
        %v977 = vadd.f32 %v798, %v976
        %v978 = vpop.f32.mrb[0].mxu0
        %979 = vmatprep.mubr.f32.mxu0 0.0
        %980 = vmatmul.mubr.f32.gmra.mrb[0].mxu0 %v893
        %v981 = vpop.f32.mrb[0].mxu0
        %v982 = vadd.f32 %v803, %v981
        %v983 = vpop.f32.mrb[0].mxu0
        %984 = vmatprep.mubr.f32.mxu0 0.0
        %985 = vmatmul.mubr.f32.gmra.mrb[0].mxu0 %v895
        %v986 = vpop.f32.mrb[0].mxu0
        %v987 = vadd.f32 %v808, %v986
        %v988 = vpop.f32.mrb[0].mxu0
        %989 = vdwg.mxu0
        %s990 = scalar_lea.vmem %s4, 8
        %v991 = vld [vmem:[%s990] sm:$0xf]
        %v992 = vcombine.low %v473, %v472
        %v993 = vcombine.low %v555, %v489
        %v995 = vunpack.c.l.s4 1983009808
        %v996 = vunpack.c.0.s8 %v995
        %v997 = vlaneseq
        %v998 = vshrl.u32 %v997, 7
        %v999 = vsub.s32 %v996, %v998
        %v1000 = vrot.slane %v992, %v999
        %v1002 = vunpack.c.l.s4 1983009808
        %v1003 = vunpack.c.0.s8 %v1002
        %v1004 = vlaneseq
        %v1005 = vshrl.u32 %v1004, 7
        %v1006 = vsub.s32 %v1003, %v1005
        %v1007 = vrot.slane %v993, %v1006
        %v1008 = vcombine.low %v1000, %v1007
        %v1009 = vcombine.low %v488, %v556
        %v1010 = vcombine.low %v505, %v504
        %v1012 = vunpack.c.l.s4 1983009808
        %v1013 = vunpack.c.0.s8 %v1012
        %v1014 = vlaneseq
        %v1015 = vshrl.u32 %v1014, 7
        %v1016 = vsub.s32 %v1013, %v1015
        %v1017 = vrot.slane %v1009, %v1016
        %v1019 = vunpack.c.l.s4 1983009808
        %v1020 = vunpack.c.0.s8 %v1019
        %v1021 = vlaneseq
        %v1022 = vshrl.u32 %v1021, 7
        %v1023 = vsub.s32 %v1020, %v1022
        %v1024 = vrot.slane %v1010, %v1023
        %v1025 = vcombine.low %v1017, %v1024
        %v1026 = vcombine.low %v557, %v521
        %v1027 = vcombine.low %v520, %v558
        %v1029 = vunpack.c.l.s4 1983009808
        %v1030 = vunpack.c.0.s8 %v1029
        %v1031 = vlaneseq
        %v1032 = vshrl.u32 %v1031, 7
        %v1033 = vsub.s32 %v1030, %v1032
        %v1034 = vrot.slane %v1026, %v1033
        %v1036 = vunpack.c.l.s4 1983009808
        %v1037 = vunpack.c.0.s8 %v1036
        %v1038 = vlaneseq
        %v1039 = vshrl.u32 %v1038, 7
        %v1040 = vsub.s32 %v1037, %v1039
        %v1041 = vrot.slane %v1027, %v1040
        %v1042 = vcombine.low %v1034, %v1041
        %v1043 = vcombine.low %v537, %v536
        %v1044 = vcombine.low %v559, %v553
        %v1046 = vunpack.c.l.s4 1983009808
        %v1047 = vunpack.c.0.s8 %v1046
        %v1048 = vlaneseq
        %v1049 = vshrl.u32 %v1048, 7
        %v1050 = vsub.s32 %v1047, %v1049
        %v1051 = vrot.slane %v1043, %v1050
        %v1053 = vunpack.c.l.s4 1983009808
        %v1054 = vunpack.c.0.s8 %v1053
        %v1055 = vlaneseq
        %v1056 = vshrl.u32 %v1055, 7
        %v1057 = vsub.s32 %v1054, %v1056
        %v1058 = vrot.slane %v1044, %v1057
        %v1059 = vcombine.low %v1051, %v1058
        %v1060 = vcombine.low %v552, %v560
        %v1062 = vunpack.c.l.s4 1983009808
        %v1063 = vunpack.c.0.s8 %v1062
        %v1064 = vlaneseq
        %v1065 = vshrl.u32 %v1064, 7
        %v1066 = vsub.s32 %v1063, %v1065
        %v1067 = vrot.slane %v1060, %v1066
        %v1068 = vsel %vm706, %v1008, 0
        %v1070 = vsel %vm706, %v1025, 0
        %v1072 = vsel %vm706, %v1042, 0
        %v1074 = vsel %vm706, %v1059, 0
        %v1076 = vsel %vm706, %v1067, 0
        %v1079 = vsel %vm717, %v991, 0
        %1081 = vmatprep.subr.mxu0 0.0
        %1082 = vmatpush1.msra.mxu0 %v1079
        %1083 = vmatprep.subr.mxu0 0.0
        %1084 = vmatpush1.msra.mxu0 0.0
        %1085 = vmatprep.subr.mxu0 0.0
        %1086 = vmatpush1.msra.mxu0 0.0
        %1087 = vmatprep.subr.mxu0 0.0
        %1088 = vmatpush1.msra.mxu0 0.0
        %1089 = vmatprep.subr.mxu0 0.0
        %1090 = vmatpush1.msra.mxu0 0.0
        %1091 = vmatprep.subr.mxu0 0.0
        %1092 = vmatpush1.msra.mxu0 0.0
        %1093 = vmatprep.subr.mxu0 0.0
        %1094 = vmatpush1.msra.mxu0 0.0
        %1095 = vmatprep.subr.mxu0 0.0
        %1096 = vmatpush1.msra.mxu0 0.0
        %1097 = vmatprep.subr.mxu0 0.0
        %1098 = vmatpush1.msra.mxu0 0.0
        %1099 = vmatprep.subr.mxu0 0.0
        %1100 = vmatpush1.msra.mxu0 0.0
        %1101 = vmatprep.subr.mxu0 0.0
        %1102 = vmatpush1.msra.mxu0 0.0
        %1103 = vmatprep.subr.mxu0 0.0
        %1104 = vmatpush1.msra.mxu0 0.0
        %1105 = vmatprep.subr.mxu0 0.0
        %1106 = vmatpush1.msra.mxu0 0.0
        %1107 = vmatprep.subr.mxu0 0.0
        %1108 = vmatpush1.msra.mxu0 0.0
        %1109 = vmatprep.subr.mxu0 0.0
        %1110 = vmatpush1.msra.mxu0 0.0
        %1111 = vmatprep.subr.mxu0 0.0
        %1112 = vmatpush1.msra.mxu0 0.0
        %1113 = vmatprep.subr.mxu0 0.0
        %1114 = vmatpush1.msra.mxu0 0.0
        %1115 = vmatprep.subr.mxu0 0.0
        %1116 = vmatpush1.msra.mxu0 0.0
        %1117 = vmatprep.subr.mxu0 0.0
        %1118 = vmatpush1.msra.mxu0 0.0
        %1119 = vmatprep.subr.mxu0 0.0
        %1120 = vmatpush1.msra.mxu0 0.0
        %1121 = vmatprep.subr.mxu0 0.0
        %1122 = vmatpush1.msra.mxu0 0.0
        %1123 = vmatprep.subr.mxu0 0.0
        %1124 = vmatpush1.msra.mxu0 0.0
        %1125 = vmatprep.subr.mxu0 0.0
        %1126 = vmatpush1.msra.mxu0 0.0
        %1127 = vmatprep.subr.mxu0 0.0
        %1128 = vmatpush1.msra.mxu0 0.0
        %1129 = vmatprep.subr.mxu0 0.0
        %1130 = vmatpush1.msra.mxu0 0.0
        %1131 = vmatprep.subr.mxu0 0.0
        %1132 = vmatpush1.msra.mxu0 0.0
        %1133 = vmatprep.subr.mxu0 0.0
        %1134 = vmatpush1.msra.mxu0 0.0
        %1135 = vmatprep.subr.mxu0 0.0
        %1136 = vmatpush1.msra.mxu0 0.0
        %1137 = vmatprep.subr.mxu0 0.0
        %1138 = vmatpush1.msra.mxu0 0.0
        %1139 = vmatprep.subr.mxu0 0.0
        %1140 = vmatpush1.msra.mxu0 0.0
        %1141 = vmatprep.subr.mxu0 0.0
        %1142 = vmatpush1.msra.mxu0 0.0
        %1143 = vmatprep.subr.mxu0 0.0
        %1144 = vmatpush1.msra.mxu0 0.0
        %1145 = vmatprep.mubr.f32.mxu0 0.0
        %1146 = vmatmul.mubr.f32.gmra.mrb[0].mxu0 %v1068
        %v1147 = vpop.f32.mrb[0].mxu0
        %v1148 = vadd.f32 0.0, %v1147
        %v1149 = vpop.f32.mrb[0].mxu0
        %1150 = vmatprep.mubr.f32.mxu0 0.0
        %1151 = vmatmul.mubr.f32.gmra.mrb[0].mxu0 %v1070
        %v1152 = vpop.f32.mrb[0].mxu0
        %v1153 = vadd.f32 0.0, %v1152
        %v1154 = vpop.f32.mrb[0].mxu0
        %1155 = vmatprep.mubr.f32.mxu0 0.0
        %1156 = vmatmul.mubr.f32.gmra.mrb[0].mxu0 %v1072
        %v1157 = vpop.f32.mrb[0].mxu0
        %v1158 = vadd.f32 0.0, %v1157
        %v1159 = vpop.f32.mrb[0].mxu0
        %1160 = vmatprep.mubr.f32.mxu0 0.0
        %1161 = vmatmul.mubr.f32.gmra.mrb[0].mxu0 %v1074
        %v1162 = vpop.f32.mrb[0].mxu0
        %v1163 = vadd.f32 0.0, %v1162
        %v1164 = vpop.f32.mrb[0].mxu0
        %1165 = vmatprep.mubr.f32.mxu0 0.0
        %1166 = vmatmul.mubr.f32.gmra.mrb[0].mxu0 %v1076
        %v1167 = vpop.f32.mrb[0].mxu0
        %v1168 = vadd.f32 0.0, %v1167
        %v1169 = vpop.f32.mrb[0].mxu0
        %1170 = vdwg.mxu0
        %v1171 = vadd.f32 %v967, %v1148
        %v1172 = vadd.f32 %v972, %v1153
        %v1173 = vadd.f32 %v977, %v1158
        %v1174 = vadd.f32 %v982, %v1163
        %v1175 = vadd.f32 %v987, %v1168
        %v1177 = vcombine.high %v450, %v450
        %v1179 = vunpack.c.l.s4 1983009808
        %v1180 = vunpack.c.0.s8 %v1179
        %v1181 = vlaneseq
        %v1182 = vshrl.u32 %v1181, 7
        %v1183 = vsub.s32 %v1180, %v1182
        %v1184 = vrot.slane %v450, %v1183
        %v1186 = vunpack.c.l.s4 1983009808
        %v1187 = vunpack.c.0.s8 %v1186
        %v1188 = vlaneseq
        %v1189 = vshrl.u32 %v1188, 7
        %v1190 = vsub.s32 %v1187, %v1189
        %v1191 = vrot.slane %v1177, %v1190
        %v1192 = vcombine.high %v1184, %v1184
        %s1193 = scalar_lea.vmem %s4, 12
        %v1194 = vld [vmem:[%s1193] sm:$0xf]
        %v1195 = vcombine.low %v481, %v489
        %v1196 = vcombine.low %v488, %v497
        %v1198 = vunpack.c.l.s4 1983009808
        %v1199 = vunpack.c.0.s8 %v1198
        %v1200 = vlaneseq
        %v1201 = vshrl.u32 %v1200, 7
        %v1202 = vsub.s32 %v1199, %v1201
        %v1203 = vrot.slane %v1195, %v1202
        %v1205 = vunpack.c.l.s4 1983009808
        %v1206 = vunpack.c.0.s8 %v1205
        %v1207 = vlaneseq
        %v1208 = vshrl.u32 %v1207, 7
        %v1209 = vsub.s32 %v1206, %v1208
        %v1210 = vrot.slane %v1196, %v1209
        %v1211 = vcombine.low %v1203, %v1210
        %v1212 = vcombine.low %v513, %v521
        %v1214 = vunpack.c.l.s4 1983009808
        %v1215 = vunpack.c.0.s8 %v1214
        %v1216 = vlaneseq
        %v1217 = vshrl.u32 %v1216, 7
        %v1218 = vsub.s32 %v1215, %v1217
        %v1219 = vrot.slane %v1212, %v1218
        %v1220 = vcombine.low %v1024, %v1219
        %v1221 = vcombine.low %v520, %v529
        %v1223 = vunpack.c.l.s4 1983009808
        %v1224 = vunpack.c.0.s8 %v1223
        %v1225 = vlaneseq
        %v1226 = vshrl.u32 %v1225, 7
        %v1227 = vsub.s32 %v1224, %v1226
        %v1228 = vrot.slane %v1221, %v1227
        %v1229 = vcombine.low %v1228, %v1051
        %v1230 = vcombine.low %v545, %v553
        %v1231 = vcombine.low %v552, %v1184
        %v1233 = vunpack.c.l.s4 1983009808
        %v1234 = vunpack.c.0.s8 %v1233
        %v1235 = vlaneseq
        %v1236 = vshrl.u32 %v1235, 7
        %v1237 = vsub.s32 %v1234, %v1236
        %v1238 = vrot.slane %v1230, %v1237
        %v1240 = vunpack.c.l.s4 1983009808
        %v1241 = vunpack.c.0.s8 %v1240
        %v1242 = vlaneseq
        %v1243 = vshrl.u32 %v1242, 7
        %v1244 = vsub.s32 %v1241, %v1243
        %v1245 = vrot.slane %v1231, %v1244
        %v1246 = vcombine.low %v1238, %v1245
        %v1247 = vcombine.low %v1192, %v1191
        %v1249 = vunpack.c.l.s4 1983009808
        %v1250 = vunpack.c.0.s8 %v1249
        %v1251 = vlaneseq
        %v1252 = vshrl.u32 %v1251, 7
        %v1253 = vsub.s32 %v1250, %v1252
        %v1254 = vrot.slane %v1247, %v1253
        %v1255 = vsel %vm706, %v1211, 0
        %v1257 = vsel %vm706, %v1220, 0
        %v1259 = vsel %vm706, %v1229, 0
        %v1261 = vsel %vm706, %v1246, 0
        %v1263 = vsel %vm706, %v1254, 0
        %v1266 = vsel %vm717, %v1194, 0
        %1268 = vmatprep.subr.mxu0 0.0
        %1269 = vmatpush1.msra.mxu0 %v1266
        %1270 = vmatprep.subr.mxu0 0.0
        %1271 = vmatpush1.msra.mxu0 0.0
        %1272 = vmatprep.subr.mxu0 0.0
        %1273 = vmatpush1.msra.mxu0 0.0
        %1274 = vmatprep.subr.mxu0 0.0
        %1275 = vmatpush1.msra.mxu0 0.0
        %1276 = vmatprep.subr.mxu0 0.0
        %1277 = vmatpush1.msra.mxu0 0.0
        %1278 = vmatprep.subr.mxu0 0.0
        %1279 = vmatpush1.msra.mxu0 0.0
        %1280 = vmatprep.subr.mxu0 0.0
        %1281 = vmatpush1.msra.mxu0 0.0
        %1282 = vmatprep.subr.mxu0 0.0
        %1283 = vmatpush1.msra.mxu0 0.0
        %1284 = vmatprep.subr.mxu0 0.0
        %1285 = vmatpush1.msra.mxu0 0.0
        %1286 = vmatprep.subr.mxu0 0.0
        %1287 = vmatpush1.msra.mxu0 0.0
        %1288 = vmatprep.subr.mxu0 0.0
        %1289 = vmatpush1.msra.mxu0 0.0
        %1290 = vmatprep.subr.mxu0 0.0
        %1291 = vmatpush1.msra.mxu0 0.0
        %1292 = vmatprep.subr.mxu0 0.0
        %1293 = vmatpush1.msra.mxu0 0.0
        %1294 = vmatprep.subr.mxu0 0.0
        %1295 = vmatpush1.msra.mxu0 0.0
        %1296 = vmatprep.subr.mxu0 0.0
        %1297 = vmatpush1.msra.mxu0 0.0
        %1298 = vmatprep.subr.mxu0 0.0
        %1299 = vmatpush1.msra.mxu0 0.0
        %1300 = vmatprep.subr.mxu0 0.0
        %1301 = vmatpush1.msra.mxu0 0.0
        %1302 = vmatprep.subr.mxu0 0.0
        %1303 = vmatpush1.msra.mxu0 0.0
        %1304 = vmatprep.subr.mxu0 0.0
        %1305 = vmatpush1.msra.mxu0 0.0
        %1306 = vmatprep.subr.mxu0 0.0
        %1307 = vmatpush1.msra.mxu0 0.0
        %1308 = vmatprep.subr.mxu0 0.0
        %1309 = vmatpush1.msra.mxu0 0.0
        %1310 = vmatprep.subr.mxu0 0.0
        %1311 = vmatpush1.msra.mxu0 0.0
        %1312 = vmatprep.subr.mxu0 0.0
        %1313 = vmatpush1.msra.mxu0 0.0
        %1314 = vmatprep.subr.mxu0 0.0
        %1315 = vmatpush1.msra.mxu0 0.0
        %1316 = vmatprep.subr.mxu0 0.0
        %1317 = vmatpush1.msra.mxu0 0.0
        %1318 = vmatprep.subr.mxu0 0.0
        %1319 = vmatpush1.msra.mxu0 0.0
        %1320 = vmatprep.subr.mxu0 0.0
        %1321 = vmatpush1.msra.mxu0 0.0
        %1322 = vmatprep.subr.mxu0 0.0
        %1323 = vmatpush1.msra.mxu0 0.0
        %1324 = vmatprep.subr.mxu0 0.0
        %1325 = vmatpush1.msra.mxu0 0.0
        %1326 = vmatprep.subr.mxu0 0.0
        %1327 = vmatpush1.msra.mxu0 0.0
        %1328 = vmatprep.subr.mxu0 0.0
        %1329 = vmatpush1.msra.mxu0 0.0
        %1330 = vmatprep.subr.mxu0 0.0
        %1331 = vmatpush1.msra.mxu0 0.0
        %1332 = vmatprep.mubr.f32.mxu0 0.0
        %1333 = vmatmul.mubr.f32.gmra.mrb[0].mxu0 %v1255
        %v1334 = vpop.f32.mrb[0].mxu0
        %v1335 = vadd.f32 0.0, %v1334
        %v1336 = vpop.f32.mrb[0].mxu0
        %1337 = vmatprep.mubr.f32.mxu0 0.0
        %1338 = vmatmul.mubr.f32.gmra.mrb[0].mxu0 %v1257
        %v1339 = vpop.f32.mrb[0].mxu0
        %v1340 = vadd.f32 0.0, %v1339
        %v1341 = vpop.f32.mrb[0].mxu0
        %1342 = vmatprep.mubr.f32.mxu0 0.0
        %1343 = vmatmul.mubr.f32.gmra.mrb[0].mxu0 %v1259
        %v1344 = vpop.f32.mrb[0].mxu0
        %v1345 = vadd.f32 0.0, %v1344
        %v1346 = vpop.f32.mrb[0].mxu0
        %1347 = vmatprep.mubr.f32.mxu0 0.0
        %1348 = vmatmul.mubr.f32.gmra.mrb[0].mxu0 %v1261
        %v1349 = vpop.f32.mrb[0].mxu0
        %v1350 = vadd.f32 0.0, %v1349
        %v1351 = vpop.f32.mrb[0].mxu0
        %1352 = vmatprep.mubr.f32.mxu0 0.0
        %1353 = vmatmul.mubr.f32.gmra.mrb[0].mxu0 %v1263
        %v1354 = vpop.f32.mrb[0].mxu0
        %v1355 = vadd.f32 0.0, %v1354
        %v1356 = vpop.f32.mrb[0].mxu0
        %1357 = vdwg.mxu0
        %v1358 = vadd.f32 %v1171, %v1335
        %v1359 = vadd.f32 %v1172, %v1340
        %v1360 = vadd.f32 %v1173, %v1345
        %v1361 = vadd.f32 %v1174, %v1350
        %v1362 = vadd.f32 %v1175, %v1355
        %v1363 = vcombine.high %v1191, %v1191
        %v1364 = vrot.slane %v1184, 7
        %v1365 = vrot.slane %v1364, 2
        %v1366 = vrot.slane %v1192, 7
        %v1367 = vsel %vm567, %v1365, %v1366
        %v1368 = vrot.slane %v1366, 2
        %v1369 = vrot.slane %v1191, 7
        %v1370 = vsel %vm567, %v1368, %v1369
        %v1371 = vrot.slane %v1369, 2
        %v1372 = vrot.slane %v1363, 7
        %v1373 = vsel %vm567, %v1371, %v1372
        %s1374 = scalar_lea.vmem %s4, 16
        %v1375 = vld [vmem:[%s1374] sm:$0xf]
        %v1376 = vcombine.low %v581, %v584
        %v1377 = vcombine.low %v587, %v591
        %v1379 = vunpack.c.l.s4 1983009808
        %v1380 = vunpack.c.0.s8 %v1379
        %v1381 = vlaneseq
        %v1382 = vshrl.u32 %v1381, 7
        %v1383 = vsub.s32 %v1380, %v1382
        %v1384 = vrot.slane %v1376, %v1383
        %v1386 = vunpack.c.l.s4 1983009808
        %v1387 = vunpack.c.0.s8 %v1386
        %v1388 = vlaneseq
        %v1389 = vshrl.u32 %v1388, 7
        %v1390 = vsub.s32 %v1387, %v1389
        %v1391 = vrot.slane %v1377, %v1390
        %v1392 = vcombine.low %v1384, %v1391
        %v1393 = vcombine.low %v594, %v597
        %v1394 = vcombine.low %v601, %v604
        %v1396 = vunpack.c.l.s4 1983009808
        %v1397 = vunpack.c.0.s8 %v1396
        %v1398 = vlaneseq
        %v1399 = vshrl.u32 %v1398, 7
        %v1400 = vsub.s32 %v1397, %v1399
        %v1401 = vrot.slane %v1393, %v1400
        %v1403 = vunpack.c.l.s4 1983009808
        %v1404 = vunpack.c.0.s8 %v1403
        %v1405 = vlaneseq
        %v1406 = vshrl.u32 %v1405, 7
        %v1407 = vsub.s32 %v1404, %v1406
        %v1408 = vrot.slane %v1394, %v1407
        %v1409 = vcombine.low %v1401, %v1408
        %v1410 = vcombine.low %v607, %v611
        %v1411 = vcombine.low %v614, %v617
        %v1413 = vunpack.c.l.s4 1983009808
        %v1414 = vunpack.c.0.s8 %v1413
        %v1415 = vlaneseq
        %v1416 = vshrl.u32 %v1415, 7
        %v1417 = vsub.s32 %v1414, %v1416
        %v1418 = vrot.slane %v1410, %v1417
        %v1420 = vunpack.c.l.s4 1983009808
        %v1421 = vunpack.c.0.s8 %v1420
        %v1422 = vlaneseq
        %v1423 = vshrl.u32 %v1422, 7
        %v1424 = vsub.s32 %v1421, %v1423
        %v1425 = vrot.slane %v1411, %v1424
        %v1426 = vcombine.low %v1418, %v1425
        %v1427 = vcombine.low %v621, %v624
        %v1428 = vcombine.low %v627, %v1367
        %v1430 = vunpack.c.l.s4 1983009808
        %v1431 = vunpack.c.0.s8 %v1430
        %v1432 = vlaneseq
        %v1433 = vshrl.u32 %v1432, 7
        %v1434 = vsub.s32 %v1431, %v1433
        %v1435 = vrot.slane %v1427, %v1434
        %v1437 = vunpack.c.l.s4 1983009808
        %v1438 = vunpack.c.0.s8 %v1437
        %v1439 = vlaneseq
        %v1440 = vshrl.u32 %v1439, 7
        %v1441 = vsub.s32 %v1438, %v1440
        %v1442 = vrot.slane %v1428, %v1441
        %v1443 = vcombine.low %v1435, %v1442
        %v1444 = vcombine.low %v1370, %v1373
        %v1446 = vunpack.c.l.s4 1983009808
        %v1447 = vunpack.c.0.s8 %v1446
        %v1448 = vlaneseq
        %v1449 = vshrl.u32 %v1448, 7
        %v1450 = vsub.s32 %v1447, %v1449
        %v1451 = vrot.slane %v1444, %v1450
        %v1452 = vsel %vm706, %v1392, 0
        %v1454 = vsel %vm706, %v1409, 0
        %v1456 = vsel %vm706, %v1426, 0
        %v1458 = vsel %vm706, %v1443, 0
        %v1460 = vsel %vm706, %v1451, 0
        %v1463 = vsel %vm717, %v1375, 0
        %1465 = vmatprep.subr.mxu0 0.0
        %1466 = vmatpush1.msra.mxu0 %v1463
        %1467 = vmatprep.subr.mxu0 0.0
        %1468 = vmatpush1.msra.mxu0 0.0
        %1469 = vmatprep.subr.mxu0 0.0
        %1470 = vmatpush1.msra.mxu0 0.0
        %1471 = vmatprep.subr.mxu0 0.0
        %1472 = vmatpush1.msra.mxu0 0.0
        %1473 = vmatprep.subr.mxu0 0.0
        %1474 = vmatpush1.msra.mxu0 0.0
        %1475 = vmatprep.subr.mxu0 0.0
        %1476 = vmatpush1.msra.mxu0 0.0
        %1477 = vmatprep.subr.mxu0 0.0
        %1478 = vmatpush1.msra.mxu0 0.0
        %1479 = vmatprep.subr.mxu0 0.0
        %1480 = vmatpush1.msra.mxu0 0.0
        %1481 = vmatprep.subr.mxu0 0.0
        %1482 = vmatpush1.msra.mxu0 0.0
        %1483 = vmatprep.subr.mxu0 0.0
        %1484 = vmatpush1.msra.mxu0 0.0
        %1485 = vmatprep.subr.mxu0 0.0
        %1486 = vmatpush1.msra.mxu0 0.0
        %1487 = vmatprep.subr.mxu0 0.0
        %1488 = vmatpush1.msra.mxu0 0.0
        %1489 = vmatprep.subr.mxu0 0.0
        %1490 = vmatpush1.msra.mxu0 0.0
        %1491 = vmatprep.subr.mxu0 0.0
        %1492 = vmatpush1.msra.mxu0 0.0
        %1493 = vmatprep.subr.mxu0 0.0
        %1494 = vmatpush1.msra.mxu0 0.0
        %1495 = vmatprep.subr.mxu0 0.0
        %1496 = vmatpush1.msra.mxu0 0.0
        %1497 = vmatprep.subr.mxu0 0.0
        %1498 = vmatpush1.msra.mxu0 0.0
        %1499 = vmatprep.subr.mxu0 0.0
        %1500 = vmatpush1.msra.mxu0 0.0
        %1501 = vmatprep.subr.mxu0 0.0
        %1502 = vmatpush1.msra.mxu0 0.0
        %1503 = vmatprep.subr.mxu0 0.0
        %1504 = vmatpush1.msra.mxu0 0.0
        %1505 = vmatprep.subr.mxu0 0.0
        %1506 = vmatpush1.msra.mxu0 0.0
        %1507 = vmatprep.subr.mxu0 0.0
        %1508 = vmatpush1.msra.mxu0 0.0
        %1509 = vmatprep.subr.mxu0 0.0
        %1510 = vmatpush1.msra.mxu0 0.0
        %1511 = vmatprep.subr.mxu0 0.0
        %1512 = vmatpush1.msra.mxu0 0.0
        %1513 = vmatprep.subr.mxu0 0.0
        %1514 = vmatpush1.msra.mxu0 0.0
        %1515 = vmatprep.subr.mxu0 0.0
        %1516 = vmatpush1.msra.mxu0 0.0
        %1517 = vmatprep.subr.mxu0 0.0
        %1518 = vmatpush1.msra.mxu0 0.0
        %1519 = vmatprep.subr.mxu0 0.0
        %1520 = vmatpush1.msra.mxu0 0.0
        %1521 = vmatprep.subr.mxu0 0.0
        %1522 = vmatpush1.msra.mxu0 0.0
        %1523 = vmatprep.subr.mxu0 0.0
        %1524 = vmatpush1.msra.mxu0 0.0
        %1525 = vmatprep.subr.mxu0 0.0
        %1526 = vmatpush1.msra.mxu0 0.0
        %1527 = vmatprep.subr.mxu0 0.0
        %1528 = vmatpush1.msra.mxu0 0.0
        %1529 = vmatprep.mubr.f32.mxu0 0.0
        %1530 = vmatmul.mubr.f32.gmra.mrb[0].mxu0 %v1452
        %v1531 = vpop.f32.mrb[0].mxu0
        %v1532 = vadd.f32 0.0, %v1531
        %v1533 = vpop.f32.mrb[0].mxu0
        %1534 = vmatprep.mubr.f32.mxu0 0.0
        %1535 = vmatmul.mubr.f32.gmra.mrb[0].mxu0 %v1454
        %v1536 = vpop.f32.mrb[0].mxu0
        %v1537 = vadd.f32 0.0, %v1536
        %v1538 = vpop.f32.mrb[0].mxu0
        %1539 = vmatprep.mubr.f32.mxu0 0.0
        %1540 = vmatmul.mubr.f32.gmra.mrb[0].mxu0 %v1456
        %v1541 = vpop.f32.mrb[0].mxu0
        %v1542 = vadd.f32 0.0, %v1541
        %v1543 = vpop.f32.mrb[0].mxu0
        %1544 = vmatprep.mubr.f32.mxu0 0.0
        %1545 = vmatmul.mubr.f32.gmra.mrb[0].mxu0 %v1458
        %v1546 = vpop.f32.mrb[0].mxu0
        %v1547 = vadd.f32 0.0, %v1546
        %v1548 = vpop.f32.mrb[0].mxu0
        %1549 = vmatprep.mubr.f32.mxu0 0.0
        %1550 = vmatmul.mubr.f32.gmra.mrb[0].mxu0 %v1460
        %v1551 = vpop.f32.mrb[0].mxu0
        %v1552 = vadd.f32 0.0, %v1551
        %v1553 = vpop.f32.mrb[0].mxu0
        %1554 = vdwg.mxu0
        %v1555 = vadd.f32 %v1358, %v1532
        %v1556 = vadd.f32 %v1359, %v1537
        %v1557 = vadd.f32 %v1360, %v1542
        %v1558 = vadd.f32 %v1361, %v1547
        %v1559 = vadd.f32 %v1362, %v1552
        %s1560 = scalar_lea.vmem %s4, 20
        %v1561 = vld [vmem:[%s1560] sm:$0xf]
        %v1562 = vcombine.low %v556, %v505
        %v1564 = vunpack.c.l.s4 1983009808
        %v1565 = vunpack.c.0.s8 %v1564
        %v1566 = vlaneseq
        %v1567 = vshrl.u32 %v1566, 7
        %v1568 = vsub.s32 %v1565, %v1567
        %v1569 = vrot.slane %v1562, %v1568
        %v1570 = vcombine.low %v836, %v1569
        %v1571 = vcombine.low %v504, %v557
        %v1573 = vunpack.c.l.s4 1983009808
        %v1574 = vunpack.c.0.s8 %v1573
        %v1575 = vlaneseq
        %v1576 = vshrl.u32 %v1575, 7
        %v1577 = vsub.s32 %v1574, %v1576
        %v1578 = vrot.slane %v1571, %v1577
        %v1579 = vcombine.low %v1578, %v860
        %v1580 = vcombine.low %v558, %v537
        %v1581 = vcombine.low %v536, %v559
        %v1583 = vunpack.c.l.s4 1983009808
        %v1584 = vunpack.c.0.s8 %v1583
        %v1585 = vlaneseq
        %v1586 = vshrl.u32 %v1585, 7
        %v1587 = vsub.s32 %v1584, %v1586
        %v1588 = vrot.slane %v1580, %v1587
        %v1590 = vunpack.c.l.s4 1983009808
        %v1591 = vunpack.c.0.s8 %v1590
        %v1592 = vlaneseq
        %v1593 = vshrl.u32 %v1592, 7
        %v1594 = vsub.s32 %v1591, %v1593
        %v1595 = vrot.slane %v1581, %v1594
        %v1596 = vcombine.low %v1588, %v1595
        %v1597 = vcombine.low %v560, %v1192
        %v1599 = vunpack.c.l.s4 1983009808
        %v1600 = vunpack.c.0.s8 %v1599
        %v1601 = vlaneseq
        %v1602 = vshrl.u32 %v1601, 7
        %v1603 = vsub.s32 %v1600, %v1602
        %v1604 = vrot.slane %v1597, %v1603
        %v1605 = vcombine.low %v886, %v1604
        %v1606 = vcombine.low %v1191, %v1363
        %v1608 = vunpack.c.l.s4 1983009808
        %v1609 = vunpack.c.0.s8 %v1608
        %v1610 = vlaneseq
        %v1611 = vshrl.u32 %v1610, 7
        %v1612 = vsub.s32 %v1609, %v1611
        %v1613 = vrot.slane %v1606, %v1612
        %v1614 = vsel %vm706, %v1570, 0
        %v1616 = vsel %vm706, %v1579, 0
        %v1618 = vsel %vm706, %v1596, 0
        %v1620 = vsel %vm706, %v1605, 0
        %v1622 = vsel %vm706, %v1613, 0
        %v1625 = vsel %vm717, %v1561, 0
        %1627 = vmatprep.subr.mxu0 0.0
        %1628 = vmatpush1.msra.mxu0 %v1625
        %1629 = vmatprep.subr.mxu0 0.0
        %1630 = vmatpush1.msra.mxu0 0.0
        %1631 = vmatprep.subr.mxu0 0.0
        %1632 = vmatpush1.msra.mxu0 0.0
        %1633 = vmatprep.subr.mxu0 0.0
        %1634 = vmatpush1.msra.mxu0 0.0
        %1635 = vmatprep.subr.mxu0 0.0
        %1636 = vmatpush1.msra.mxu0 0.0
        %1637 = vmatprep.subr.mxu0 0.0
        %1638 = vmatpush1.msra.mxu0 0.0
        %1639 = vmatprep.subr.mxu0 0.0
        %1640 = vmatpush1.msra.mxu0 0.0
        %1641 = vmatprep.subr.mxu0 0.0
        %1642 = vmatpush1.msra.mxu0 0.0
        %1643 = vmatprep.subr.mxu0 0.0
        %1644 = vmatpush1.msra.mxu0 0.0
        %1645 = vmatprep.subr.mxu0 0.0
        %1646 = vmatpush1.msra.mxu0 0.0
        %1647 = vmatprep.subr.mxu0 0.0
        %1648 = vmatpush1.msra.mxu0 0.0
        %1649 = vmatprep.subr.mxu0 0.0
        %1650 = vmatpush1.msra.mxu0 0.0
        %1651 = vmatprep.subr.mxu0 0.0
        %1652 = vmatpush1.msra.mxu0 0.0
        %1653 = vmatprep.subr.mxu0 0.0
        %1654 = vmatpush1.msra.mxu0 0.0
        %1655 = vmatprep.subr.mxu0 0.0
        %1656 = vmatpush1.msra.mxu0 0.0
        %1657 = vmatprep.subr.mxu0 0.0
        %1658 = vmatpush1.msra.mxu0 0.0
        %1659 = vmatprep.subr.mxu0 0.0
        %1660 = vmatpush1.msra.mxu0 0.0
        %1661 = vmatprep.subr.mxu0 0.0
        %1662 = vmatpush1.msra.mxu0 0.0
        %1663 = vmatprep.subr.mxu0 0.0
        %1664 = vmatpush1.msra.mxu0 0.0
        %1665 = vmatprep.subr.mxu0 0.0
        %1666 = vmatpush1.msra.mxu0 0.0
        %1667 = vmatprep.subr.mxu0 0.0
        %1668 = vmatpush1.msra.mxu0 0.0
        %1669 = vmatprep.subr.mxu0 0.0
        %1670 = vmatpush1.msra.mxu0 0.0
        %1671 = vmatprep.subr.mxu0 0.0
        %1672 = vmatpush1.msra.mxu0 0.0
        %1673 = vmatprep.subr.mxu0 0.0
        %1674 = vmatpush1.msra.mxu0 0.0
        %1675 = vmatprep.subr.mxu0 0.0
        %1676 = vmatpush1.msra.mxu0 0.0
        %1677 = vmatprep.subr.mxu0 0.0
        %1678 = vmatpush1.msra.mxu0 0.0
        %1679 = vmatprep.subr.mxu0 0.0
        %1680 = vmatpush1.msra.mxu0 0.0
        %1681 = vmatprep.subr.mxu0 0.0
        %1682 = vmatpush1.msra.mxu0 0.0
        %1683 = vmatprep.subr.mxu0 0.0
        %1684 = vmatpush1.msra.mxu0 0.0
        %1685 = vmatprep.subr.mxu0 0.0
        %1686 = vmatpush1.msra.mxu0 0.0
        %1687 = vmatprep.subr.mxu0 0.0
        %1688 = vmatpush1.msra.mxu0 0.0
        %1689 = vmatprep.subr.mxu0 0.0
        %1690 = vmatpush1.msra.mxu0 0.0
        %1691 = vmatprep.mubr.f32.mxu0 0.0
        %1692 = vmatmul.mubr.f32.gmra.mrb[0].mxu0 %v1614
        %v1693 = vpop.f32.mrb[0].mxu0
        %v1694 = vadd.f32 0.0, %v1693
        %v1695 = vpop.f32.mrb[0].mxu0
        %1696 = vmatprep.mubr.f32.mxu0 0.0
        %1697 = vmatmul.mubr.f32.gmra.mrb[0].mxu0 %v1616
        %v1698 = vpop.f32.mrb[0].mxu0
        %v1699 = vadd.f32 0.0, %v1698
        %v1700 = vpop.f32.mrb[0].mxu0
        %1701 = vmatprep.mubr.f32.mxu0 0.0
        %1702 = vmatmul.mubr.f32.gmra.mrb[0].mxu0 %v1618
        %v1703 = vpop.f32.mrb[0].mxu0
        %v1704 = vadd.f32 0.0, %v1703
        %v1705 = vpop.f32.mrb[0].mxu0
        %1706 = vmatprep.mubr.f32.mxu0 0.0
        %1707 = vmatmul.mubr.f32.gmra.mrb[0].mxu0 %v1620
        %v1708 = vpop.f32.mrb[0].mxu0
        %v1709 = vadd.f32 0.0, %v1708
        %v1710 = vpop.f32.mrb[0].mxu0
        %1711 = vmatprep.mubr.f32.mxu0 0.0
        %1712 = vmatmul.mubr.f32.gmra.mrb[0].mxu0 %v1622
        %v1713 = vpop.f32.mrb[0].mxu0
        %v1714 = vadd.f32 0.0, %v1713
        %v1715 = vpop.f32.mrb[0].mxu0
        %1716 = vdwg.mxu0
        %v1717 = vadd.f32 %v1555, %v1694
        %v1718 = vadd.f32 %v1556, %v1699
        %v1719 = vadd.f32 %v1557, %v1704
        %v1720 = vadd.f32 %v1558, %v1709
        %v1721 = vadd.f32 %v1559, %v1714
        %v1723 = vcombine.high %v451, %v451
        %v1725 = vunpack.c.l.s4 1983009808
        %v1726 = vunpack.c.0.s8 %v1725
        %v1727 = vlaneseq
        %v1728 = vshrl.u32 %v1727, 7
        %v1729 = vsub.s32 %v1726, %v1728
        %v1730 = vrot.slane %v451, %v1729
        %v1732 = vunpack.c.l.s4 1983009808
        %v1733 = vunpack.c.0.s8 %v1732
        %v1734 = vlaneseq
        %v1735 = vshrl.u32 %v1734, 7
        %v1736 = vsub.s32 %v1733, %v1735
        %v1737 = vrot.slane %v1723, %v1736
        %v1738 = vcombine.high %v1730, %v1730
        %s1739 = scalar_lea.vmem %s4, 24
        %v1740 = vld [vmem:[%s1739] sm:$0xf]
        %v1741 = vcombine.low %v843, %v853
        %v1742 = vcombine.low %v860, %v870
        %v1743 = vcombine.low %v877, %v886
        %v1744 = vcombine.low %v1184, %v1192
        %v1745 = vcombine.low %v1191, %v1730
        %v1747 = vunpack.c.l.s4 1983009808
        %v1748 = vunpack.c.0.s8 %v1747
        %v1749 = vlaneseq
        %v1750 = vshrl.u32 %v1749, 7
        %v1751 = vsub.s32 %v1748, %v1750
        %v1752 = vrot.slane %v1744, %v1751
        %v1754 = vunpack.c.l.s4 1983009808
        %v1755 = vunpack.c.0.s8 %v1754
        %v1756 = vlaneseq
        %v1757 = vshrl.u32 %v1756, 7
        %v1758 = vsub.s32 %v1755, %v1757
        %v1759 = vrot.slane %v1745, %v1758
        %v1760 = vcombine.low %v1752, %v1759
        %v1761 = vcombine.low %v1738, %v1737
        %v1763 = vunpack.c.l.s4 1983009808
        %v1764 = vunpack.c.0.s8 %v1763
        %v1765 = vlaneseq
        %v1766 = vshrl.u32 %v1765, 7
        %v1767 = vsub.s32 %v1764, %v1766
        %v1768 = vrot.slane %v1761, %v1767
        %v1769 = vsel %vm706, %v1741, 0
        %v1771 = vsel %vm706, %v1742, 0
        %v1773 = vsel %vm706, %v1743, 0
        %v1775 = vsel %vm706, %v1760, 0
        %v1777 = vsel %vm706, %v1768, 0
        %v1780 = vsel %vm717, %v1740, 0
        %1782 = vmatprep.subr.mxu0 0.0
        %1783 = vmatpush1.msra.mxu0 %v1780
        %1784 = vmatprep.subr.mxu0 0.0
        %1785 = vmatpush1.msra.mxu0 0.0
        %1786 = vmatprep.subr.mxu0 0.0
        %1787 = vmatpush1.msra.mxu0 0.0
        %1788 = vmatprep.subr.mxu0 0.0
        %1789 = vmatpush1.msra.mxu0 0.0
        %1790 = vmatprep.subr.mxu0 0.0
        %1791 = vmatpush1.msra.mxu0 0.0
        %1792 = vmatprep.subr.mxu0 0.0
        %1793 = vmatpush1.msra.mxu0 0.0
        %1794 = vmatprep.subr.mxu0 0.0
        %1795 = vmatpush1.msra.mxu0 0.0
        %1796 = vmatprep.subr.mxu0 0.0
        %1797 = vmatpush1.msra.mxu0 0.0
        %1798 = vmatprep.subr.mxu0 0.0
        %1799 = vmatpush1.msra.mxu0 0.0
        %1800 = vmatprep.subr.mxu0 0.0
        %1801 = vmatpush1.msra.mxu0 0.0
        %1802 = vmatprep.subr.mxu0 0.0
        %1803 = vmatpush1.msra.mxu0 0.0
        %1804 = vmatprep.subr.mxu0 0.0
        %1805 = vmatpush1.msra.mxu0 0.0
        %1806 = vmatprep.subr.mxu0 0.0
        %1807 = vmatpush1.msra.mxu0 0.0
        %1808 = vmatprep.subr.mxu0 0.0
        %1809 = vmatpush1.msra.mxu0 0.0
        %1810 = vmatprep.subr.mxu0 0.0
        %1811 = vmatpush1.msra.mxu0 0.0
        %1812 = vmatprep.subr.mxu0 0.0
        %1813 = vmatpush1.msra.mxu0 0.0
        %1814 = vmatprep.subr.mxu0 0.0
        %1815 = vmatpush1.msra.mxu0 0.0
        %1816 = vmatprep.subr.mxu0 0.0
        %1817 = vmatpush1.msra.mxu0 0.0
        %1818 = vmatprep.subr.mxu0 0.0
        %1819 = vmatpush1.msra.mxu0 0.0
        %1820 = vmatprep.subr.mxu0 0.0
        %1821 = vmatpush1.msra.mxu0 0.0
        %1822 = vmatprep.subr.mxu0 0.0
        %1823 = vmatpush1.msra.mxu0 0.0
        %1824 = vmatprep.subr.mxu0 0.0
        %1825 = vmatpush1.msra.mxu0 0.0
        %1826 = vmatprep.subr.mxu0 0.0
        %1827 = vmatpush1.msra.mxu0 0.0
        %1828 = vmatprep.subr.mxu0 0.0
        %1829 = vmatpush1.msra.mxu0 0.0
        %1830 = vmatprep.subr.mxu0 0.0
        %1831 = vmatpush1.msra.mxu0 0.0
        %1832 = vmatprep.subr.mxu0 0.0
        %1833 = vmatpush1.msra.mxu0 0.0
        %1834 = vmatprep.subr.mxu0 0.0
        %1835 = vmatpush1.msra.mxu0 0.0
        %1836 = vmatprep.subr.mxu0 0.0
        %1837 = vmatpush1.msra.mxu0 0.0
        %1838 = vmatprep.subr.mxu0 0.0
        %1839 = vmatpush1.msra.mxu0 0.0
        %1840 = vmatprep.subr.mxu0 0.0
        %1841 = vmatpush1.msra.mxu0 0.0
        %1842 = vmatprep.subr.mxu0 0.0
        %1843 = vmatpush1.msra.mxu0 0.0
        %1844 = vmatprep.subr.mxu0 0.0
        %1845 = vmatpush1.msra.mxu0 0.0
        %1846 = vmatprep.mubr.f32.mxu0 0.0
        %1847 = vmatmul.mubr.f32.gmra.mrb[0].mxu0 %v1769
        %v1848 = vpop.f32.mrb[0].mxu0
        %v1849 = vadd.f32 0.0, %v1848
        %v1850 = vpop.f32.mrb[0].mxu0
        %1851 = vmatprep.mubr.f32.mxu0 0.0
        %1852 = vmatmul.mubr.f32.gmra.mrb[0].mxu0 %v1771
        %v1853 = vpop.f32.mrb[0].mxu0
        %v1854 = vadd.f32 0.0, %v1853
        %v1855 = vpop.f32.mrb[0].mxu0
        %1856 = vmatprep.mubr.f32.mxu0 0.0
        %1857 = vmatmul.mubr.f32.gmra.mrb[0].mxu0 %v1773
        %v1858 = vpop.f32.mrb[0].mxu0
        %v1859 = vadd.f32 0.0, %v1858
        %v1860 = vpop.f32.mrb[0].mxu0
        %1861 = vmatprep.mubr.f32.mxu0 0.0
        %1862 = vmatmul.mubr.f32.gmra.mrb[0].mxu0 %v1775
        %v1863 = vpop.f32.mrb[0].mxu0
        %v1864 = vadd.f32 0.0, %v1863
        %v1865 = vpop.f32.mrb[0].mxu0
        %1866 = vmatprep.mubr.f32.mxu0 0.0
        %1867 = vmatmul.mubr.f32.gmra.mrb[0].mxu0 %v1777
        %v1868 = vpop.f32.mrb[0].mxu0
        %v1869 = vadd.f32 0.0, %v1868
        %v1870 = vpop.f32.mrb[0].mxu0
        %1871 = vdwg.mxu0
        %v1872 = vadd.f32 %v1717, %v1849
        %v1873 = vadd.f32 %v1718, %v1854
        %v1874 = vadd.f32 %v1719, %v1859
        %v1875 = vadd.f32 %v1720, %v1864
        %v1876 = vadd.f32 %v1721, %v1869
        %v1877 = vcombine.high %v1737, %v1737
        %v1878 = vrot.slane %v1730, 7
        %v1879 = vrot.slane %v1878, 2
        %v1880 = vrot.slane %v1738, 7
        %v1881 = vsel %vm567, %v1879, %v1880
        %v1882 = vrot.slane %v1880, 2
        %v1883 = vrot.slane %v1737, 7
        %v1884 = vsel %vm567, %v1882, %v1883
        %v1885 = vrot.slane %v1883, 2
        %v1886 = vrot.slane %v1877, 7
        %v1887 = vsel %vm567, %v1885, %v1886
        %s1888 = scalar_lea.vmem %s4, 28
        %v1889 = vld [vmem:[%s1888] sm:$0xf]
        %v1890 = vcombine.low %v662, %v672
        %v1891 = vcombine.low %v679, %v689
        %v1892 = vcombine.low %v696, %v705
        %v1893 = vcombine.low %v1367, %v1370
        %v1894 = vcombine.low %v1373, %v1881
        %v1896 = vunpack.c.l.s4 1983009808
        %v1897 = vunpack.c.0.s8 %v1896
        %v1898 = vlaneseq
        %v1899 = vshrl.u32 %v1898, 7
        %v1900 = vsub.s32 %v1897, %v1899
        %v1901 = vrot.slane %v1893, %v1900
        %v1903 = vunpack.c.l.s4 1983009808
        %v1904 = vunpack.c.0.s8 %v1903
        %v1905 = vlaneseq
        %v1906 = vshrl.u32 %v1905, 7
        %v1907 = vsub.s32 %v1904, %v1906
        %v1908 = vrot.slane %v1894, %v1907
        %v1909 = vcombine.low %v1901, %v1908
        %v1910 = vcombine.low %v1884, %v1887
        %v1912 = vunpack.c.l.s4 1983009808
        %v1913 = vunpack.c.0.s8 %v1912
        %v1914 = vlaneseq
        %v1915 = vshrl.u32 %v1914, 7
        %v1916 = vsub.s32 %v1913, %v1915
        %v1917 = vrot.slane %v1910, %v1916
        %v1918 = vsel %vm706, %v1890, 0
        %v1920 = vsel %vm706, %v1891, 0
        %v1922 = vsel %vm706, %v1892, 0
        %v1924 = vsel %vm706, %v1909, 0
        %v1926 = vsel %vm706, %v1917, 0
        %v1929 = vsel %vm717, %v1889, 0
        %1931 = vmatprep.subr.mxu0 0.0
        %1932 = vmatpush1.msra.mxu0 %v1929
        %1933 = vmatprep.subr.mxu0 0.0
        %1934 = vmatpush1.msra.mxu0 0.0
        %1935 = vmatprep.subr.mxu0 0.0
        %1936 = vmatpush1.msra.mxu0 0.0
        %1937 = vmatprep.subr.mxu0 0.0
        %1938 = vmatpush1.msra.mxu0 0.0
        %1939 = vmatprep.subr.mxu0 0.0
        %1940 = vmatpush1.msra.mxu0 0.0
        %1941 = vmatprep.subr.mxu0 0.0
        %1942 = vmatpush1.msra.mxu0 0.0
        %1943 = vmatprep.subr.mxu0 0.0
        %1944 = vmatpush1.msra.mxu0 0.0
        %1945 = vmatprep.subr.mxu0 0.0
        %1946 = vmatpush1.msra.mxu0 0.0
        %1947 = vmatprep.subr.mxu0 0.0
        %1948 = vmatpush1.msra.mxu0 0.0
        %1949 = vmatprep.subr.mxu0 0.0
        %1950 = vmatpush1.msra.mxu0 0.0
        %1951 = vmatprep.subr.mxu0 0.0
        %1952 = vmatpush1.msra.mxu0 0.0
        %1953 = vmatprep.subr.mxu0 0.0
        %1954 = vmatpush1.msra.mxu0 0.0
        %1955 = vmatprep.subr.mxu0 0.0
        %1956 = vmatpush1.msra.mxu0 0.0
        %1957 = vmatprep.subr.mxu0 0.0
        %1958 = vmatpush1.msra.mxu0 0.0
        %1959 = vmatprep.subr.mxu0 0.0
        %1960 = vmatpush1.msra.mxu0 0.0
        %1961 = vmatprep.subr.mxu0 0.0
        %1962 = vmatpush1.msra.mxu0 0.0
        %1963 = vmatprep.subr.mxu0 0.0
        %1964 = vmatpush1.msra.mxu0 0.0
        %1965 = vmatprep.subr.mxu0 0.0
        %1966 = vmatpush1.msra.mxu0 0.0
        %1967 = vmatprep.subr.mxu0 0.0
        %1968 = vmatpush1.msra.mxu0 0.0
        %1969 = vmatprep.subr.mxu0 0.0
        %1970 = vmatpush1.msra.mxu0 0.0
        %1971 = vmatprep.subr.mxu0 0.0
        %1972 = vmatpush1.msra.mxu0 0.0
        %1973 = vmatprep.subr.mxu0 0.0
        %1974 = vmatpush1.msra.mxu0 0.0
        %1975 = vmatprep.subr.mxu0 0.0
        %1976 = vmatpush1.msra.mxu0 0.0
        %1977 = vmatprep.subr.mxu0 0.0
        %1978 = vmatpush1.msra.mxu0 0.0
        %1979 = vmatprep.subr.mxu0 0.0
        %1980 = vmatpush1.msra.mxu0 0.0
        %1981 = vmatprep.subr.mxu0 0.0
        %1982 = vmatpush1.msra.mxu0 0.0
        %1983 = vmatprep.subr.mxu0 0.0
        %1984 = vmatpush1.msra.mxu0 0.0
        %1985 = vmatprep.subr.mxu0 0.0
        %1986 = vmatpush1.msra.mxu0 0.0
        %1987 = vmatprep.subr.mxu0 0.0
        %1988 = vmatpush1.msra.mxu0 0.0
        %1989 = vmatprep.subr.mxu0 0.0
        %1990 = vmatpush1.msra.mxu0 0.0
        %1991 = vmatprep.subr.mxu0 0.0
        %1992 = vmatpush1.msra.mxu0 0.0
        %1993 = vmatprep.subr.mxu0 0.0
        %1994 = vmatpush1.msra.mxu0 0.0
        %1995 = vmatprep.mubr.f32.mxu0 0.0
        %1996 = vmatmul.mubr.f32.gmra.mrb[0].mxu0 %v1918
        %v1997 = vpop.f32.mrb[0].mxu0
        %v1998 = vadd.f32 0.0, %v1997
        %v1999 = vpop.f32.mrb[0].mxu0
        %2000 = vmatprep.mubr.f32.mxu0 0.0
        %2001 = vmatmul.mubr.f32.gmra.mrb[0].mxu0 %v1920
        %v2002 = vpop.f32.mrb[0].mxu0
        %v2003 = vadd.f32 0.0, %v2002
        %v2004 = vpop.f32.mrb[0].mxu0
        %2005 = vmatprep.mubr.f32.mxu0 0.0
        %2006 = vmatmul.mubr.f32.gmra.mrb[0].mxu0 %v1922
        %v2007 = vpop.f32.mrb[0].mxu0
        %v2008 = vadd.f32 0.0, %v2007
        %v2009 = vpop.f32.mrb[0].mxu0
        %2010 = vmatprep.mubr.f32.mxu0 0.0
        %2011 = vmatmul.mubr.f32.gmra.mrb[0].mxu0 %v1924
        %v2012 = vpop.f32.mrb[0].mxu0
        %v2013 = vadd.f32 0.0, %v2012
        %v2014 = vpop.f32.mrb[0].mxu0
        %2015 = vmatprep.mubr.f32.mxu0 0.0
        %2016 = vmatmul.mubr.f32.gmra.mrb[0].mxu0 %v1926
        %v2017 = vpop.f32.mrb[0].mxu0
        %v2018 = vadd.f32 0.0, %v2017
        %v2019 = vpop.f32.mrb[0].mxu0
        %2020 = vdwg.mxu0
        %v2021 = vadd.f32 %v1872, %v1998
        %v2022 = vadd.f32 %v1873, %v2003
        %v2023 = vadd.f32 %v1874, %v2008
        %v2024 = vadd.f32 %v1875, %v2013
        %v2025 = vadd.f32 %v1876, %v2018
        %s2026 = scalar_lea.vmem %s4, 32
        %v2027 = vld [vmem:[%s2026] sm:$0xf]
        %v2028 = vcombine.low %v1024, %v1034
        %v2029 = vcombine.low %v1041, %v1051
        %v2030 = vcombine.low %v1058, %v1067
        %v2031 = vcombine.low %v1363, %v1738
        %v2033 = vunpack.c.l.s4 1983009808
        %v2034 = vunpack.c.0.s8 %v2033
        %v2035 = vlaneseq
        %v2036 = vshrl.u32 %v2035, 7
        %v2037 = vsub.s32 %v2034, %v2036
        %v2038 = vrot.slane %v2031, %v2037
        %v2039 = vcombine.low %v1254, %v2038
        %v2040 = vcombine.low %v1737, %v1877
        %v2042 = vunpack.c.l.s4 1983009808
        %v2043 = vunpack.c.0.s8 %v2042
        %v2044 = vlaneseq
        %v2045 = vshrl.u32 %v2044, 7
        %v2046 = vsub.s32 %v2043, %v2045
        %v2047 = vrot.slane %v2040, %v2046
        %v2048 = vsel %vm706, %v2028, 0
        %v2050 = vsel %vm706, %v2029, 0
        %v2052 = vsel %vm706, %v2030, 0
        %v2054 = vsel %vm706, %v2039, 0
        %v2056 = vsel %vm706, %v2047, 0
        %v2059 = vsel %vm717, %v2027, 0
        %2061 = vmatprep.subr.mxu0 0.0
        %2062 = vmatpush1.msra.mxu0 %v2059
        %2063 = vmatprep.subr.mxu0 0.0
        %2064 = vmatpush1.msra.mxu0 0.0
        %2065 = vmatprep.subr.mxu0 0.0
        %2066 = vmatpush1.msra.mxu0 0.0
        %2067 = vmatprep.subr.mxu0 0.0
        %2068 = vmatpush1.msra.mxu0 0.0
        %2069 = vmatprep.subr.mxu0 0.0
        %2070 = vmatpush1.msra.mxu0 0.0
        %2071 = vmatprep.subr.mxu0 0.0
        %2072 = vmatpush1.msra.mxu0 0.0
        %2073 = vmatprep.subr.mxu0 0.0
        %2074 = vmatpush1.msra.mxu0 0.0
        %2075 = vmatprep.subr.mxu0 0.0
        %2076 = vmatpush1.msra.mxu0 0.0
        %2077 = vmatprep.subr.mxu0 0.0
        %2078 = vmatpush1.msra.mxu0 0.0
        %2079 = vmatprep.subr.mxu0 0.0
        %2080 = vmatpush1.msra.mxu0 0.0
        %2081 = vmatprep.subr.mxu0 0.0
        %2082 = vmatpush1.msra.mxu0 0.0
        %2083 = vmatprep.subr.mxu0 0.0
        %2084 = vmatpush1.msra.mxu0 0.0
        %2085 = vmatprep.subr.mxu0 0.0
        %2086 = vmatpush1.msra.mxu0 0.0
        %2087 = vmatprep.subr.mxu0 0.0
        %2088 = vmatpush1.msra.mxu0 0.0
        %2089 = vmatprep.subr.mxu0 0.0
        %2090 = vmatpush1.msra.mxu0 0.0
        %2091 = vmatprep.subr.mxu0 0.0
        %2092 = vmatpush1.msra.mxu0 0.0
        %2093 = vmatprep.subr.mxu0 0.0
        %2094 = vmatpush1.msra.mxu0 0.0
        %2095 = vmatprep.subr.mxu0 0.0
        %2096 = vmatpush1.msra.mxu0 0.0
        %2097 = vmatprep.subr.mxu0 0.0
        %2098 = vmatpush1.msra.mxu0 0.0
        %2099 = vmatprep.subr.mxu0 0.0
        %2100 = vmatpush1.msra.mxu0 0.0
        %2101 = vmatprep.subr.mxu0 0.0
        %2102 = vmatpush1.msra.mxu0 0.0
        %2103 = vmatprep.subr.mxu0 0.0
        %2104 = vmatpush1.msra.mxu0 0.0
        %2105 = vmatprep.subr.mxu0 0.0
        %2106 = vmatpush1.msra.mxu0 0.0
        %2107 = vmatprep.subr.mxu0 0.0
        %2108 = vmatpush1.msra.mxu0 0.0
        %2109 = vmatprep.subr.mxu0 0.0
        %2110 = vmatpush1.msra.mxu0 0.0
        %2111 = vmatprep.subr.mxu0 0.0
        %2112 = vmatpush1.msra.mxu0 0.0
        %2113 = vmatprep.subr.mxu0 0.0
        %2114 = vmatpush1.msra.mxu0 0.0
        %2115 = vmatprep.subr.mxu0 0.0
        %2116 = vmatpush1.msra.mxu0 0.0
        %2117 = vmatprep.subr.mxu0 0.0
        %2118 = vmatpush1.msra.mxu0 0.0
        %2119 = vmatprep.subr.mxu0 0.0
        %2120 = vmatpush1.msra.mxu0 0.0
        %2121 = vmatprep.subr.mxu0 0.0
        %2122 = vmatpush1.msra.mxu0 0.0
        %2123 = vmatprep.subr.mxu0 0.0
        %2124 = vmatpush1.msra.mxu0 0.0
        %2125 = vmatprep.mubr.f32.mxu0 0.0
        %2126 = vmatmul.mubr.f32.gmra.mrb[0].mxu0 %v2048
        %v2127 = vpop.f32.mrb[0].mxu0
        %v2128 = vadd.f32 0.0, %v2127
        %v2129 = vpop.f32.mrb[0].mxu0
        %2130 = vmatprep.mubr.f32.mxu0 0.0
        %2131 = vmatmul.mubr.f32.gmra.mrb[0].mxu0 %v2050
        %v2132 = vpop.f32.mrb[0].mxu0
        %v2133 = vadd.f32 0.0, %v2132
        %v2134 = vpop.f32.mrb[0].mxu0
        %2135 = vmatprep.mubr.f32.mxu0 0.0
        %2136 = vmatmul.mubr.f32.gmra.mrb[0].mxu0 %v2052
        %v2137 = vpop.f32.mrb[0].mxu0
        %v2138 = vadd.f32 0.0, %v2137
        %v2139 = vpop.f32.mrb[0].mxu0
        %2140 = vmatprep.mubr.f32.mxu0 0.0
        %2141 = vmatmul.mubr.f32.gmra.mrb[0].mxu0 %v2054
        %v2142 = vpop.f32.mrb[0].mxu0
        %v2143 = vadd.f32 0.0, %v2142
        %v2144 = vpop.f32.mrb[0].mxu0
        %2145 = vmatprep.mubr.f32.mxu0 0.0
        %2146 = vmatmul.mubr.f32.gmra.mrb[0].mxu0 %v2056
        %v2147 = vpop.f32.mrb[0].mxu0
        %v2148 = vadd.f32 0.0, %v2147
        %v2149 = vpop.f32.mrb[0].mxu0
        %2150 = vdwg.mxu0
        %v2151 = vadd.f32 %v2021, %v2128
        %v2152 = vadd.f32 %v2022, %v2133
        %v2153 = vadd.f32 %v2023, %v2138
        %v2154 = vadd.f32 %v2024, %v2143
        %v2155 = vadd.f32 %v2025, %v2148
        %v2161 = vcombine.high %v2151, %v2151
        %v2163 = vunpack.c.l.s4 1983009808
        %v2164 = vunpack.c.0.s8 %v2163
        %v2165 = vlaneseq
        %v2166 = vshrl.u32 %v2165, 7
        %v2167 = vsub.s32 %v2164, %v2166
        %v2168 = vrot.slane %v2151, %v2167
        %v2170 = vunpack.c.l.s4 1983009808
        %v2171 = vunpack.c.0.s8 %v2170
        %v2172 = vlaneseq
        %v2173 = vshrl.u32 %v2172, 7
        %v2174 = vsub.s32 %v2171, %v2173
        %v2175 = vrot.slane %v2161, %v2174
        %v2176 = vcombine.high %v2168, %v2168
        %v2177 = vcombine.high %v2175, %v2175
        %v2178 = vcombine.high %v2152, %v2152
        %v2180 = vunpack.c.l.s4 1983009808
        %v2181 = vunpack.c.0.s8 %v2180
        %v2182 = vlaneseq
        %v2183 = vshrl.u32 %v2182, 7
        %v2184 = vsub.s32 %v2181, %v2183
        %v2185 = vrot.slane %v2152, %v2184
        %v2187 = vunpack.c.l.s4 1983009808
        %v2188 = vunpack.c.0.s8 %v2187
        %v2189 = vlaneseq
        %v2190 = vshrl.u32 %v2189, 7
        %v2191 = vsub.s32 %v2188, %v2190
        %v2192 = vrot.slane %v2178, %v2191
        %v2193 = vcombine.high %v2185, %v2185
        %v2194 = vcombine.high %v2192, %v2192
        %v2195 = vcombine.high %v2153, %v2153
        %v2197 = vunpack.c.l.s4 1983009808
        %v2198 = vunpack.c.0.s8 %v2197
        %v2199 = vlaneseq
        %v2200 = vshrl.u32 %v2199, 7
        %v2201 = vsub.s32 %v2198, %v2200
        %v2202 = vrot.slane %v2153, %v2201
        %v2204 = vunpack.c.l.s4 1983009808
        %v2205 = vunpack.c.0.s8 %v2204
        %v2206 = vlaneseq
        %v2207 = vshrl.u32 %v2206, 7
        %v2208 = vsub.s32 %v2205, %v2207
        %v2209 = vrot.slane %v2195, %v2208
        %v2210 = vcombine.high %v2202, %v2202
        %v2211 = vcombine.high %v2209, %v2209
        %v2212 = vcombine.high %v2154, %v2154
        %v2214 = vunpack.c.l.s4 1983009808
        %v2215 = vunpack.c.0.s8 %v2214
        %v2216 = vlaneseq
        %v2217 = vshrl.u32 %v2216, 7
        %v2218 = vsub.s32 %v2215, %v2217
        %v2219 = vrot.slane %v2154, %v2218
        %v2221 = vunpack.c.l.s4 1983009808
        %v2222 = vunpack.c.0.s8 %v2221
        %v2223 = vlaneseq
        %v2224 = vshrl.u32 %v2223, 7
        %v2225 = vsub.s32 %v2222, %v2224
        %v2226 = vrot.slane %v2212, %v2225
        %v2227 = vcombine.high %v2219, %v2219
        %v2228 = vcombine.high %v2226, %v2226
        %v2230 = vunpack.c.l.s4 1983009808
        %v2231 = vunpack.c.0.s8 %v2230
        %v2232 = vlaneseq
        %v2233 = vshrl.u32 %v2232, 7
        %v2234 = vsub.s32 %v2231, %v2233
        %v2235 = vrot.slane %v2155, %v2234
        %v2236 = vcombine.high %v2235, %v2235
        %v2237 = vcombine.low %v2168, %v2176
        %v2239 = vunpack.c.l.s4 1983009808
        %v2240 = vunpack.c.0.s8 %v2239
        %v2241 = vlaneseq
        %v2242 = vshrl.u32 %v2241, 7
        %v2243 = vsub.s32 %v2240, %v2242
        %v2244 = vrot.slane %v2237, %v2243
        %v2246 = vunpack.c.l.s4 1983009808
        %v2247 = vunpack.c.0.s8 %v2246
        %v2248 = vlaneseq
        %v2249 = vshrl.u32 %v2248, 7
        %v2250 = vsub.s32 %v2247, %v2249
        %v2251 = vrot.slane %v2175, %v2250
        %v2252 = vcombine.low %v2244, %v2251
        %v2253 = vcombine.low %v2177, %v2185
        %v2255 = vunpack.c.l.s4 1983009808
        %v2256 = vunpack.c.0.s8 %v2255
        %v2257 = vlaneseq
        %v2258 = vshrl.u32 %v2257, 7
        %v2259 = vsub.s32 %v2256, %v2258
        %v2260 = vrot.slane %v2253, %v2259
        %v2262 = vunpack.c.l.s4 1983009808
        %v2263 = vunpack.c.0.s8 %v2262
        %v2264 = vlaneseq
        %v2265 = vshrl.u32 %v2264, 7
        %v2266 = vsub.s32 %v2263, %v2265
        %v2267 = vrot.slane %v2193, %v2266
        %v2268 = vcombine.low %v2260, %v2267
        %v2269 = vcombine.low %v2192, %v2194
        %v2271 = vunpack.c.l.s4 1983009808
        %v2272 = vunpack.c.0.s8 %v2271
        %v2273 = vlaneseq
        %v2274 = vshrl.u32 %v2273, 7
        %v2275 = vsub.s32 %v2272, %v2274
        %v2276 = vrot.slane %v2269, %v2275
        %v2278 = vunpack.c.l.s4 1983009808
        %v2279 = vunpack.c.0.s8 %v2278
        %v2280 = vlaneseq
        %v2281 = vshrl.u32 %v2280, 7
        %v2282 = vsub.s32 %v2279, %v2281
        %v2283 = vrot.slane %v2202, %v2282
        %v2284 = vcombine.low %v2276, %v2283
        %v2285 = vcombine.low %v2210, %v2209
        %v2287 = vunpack.c.l.s4 1983009808
        %v2288 = vunpack.c.0.s8 %v2287
        %v2289 = vlaneseq
        %v2290 = vshrl.u32 %v2289, 7
        %v2291 = vsub.s32 %v2288, %v2290
        %v2292 = vrot.slane %v2285, %v2291
        %v2294 = vunpack.c.l.s4 1983009808
        %v2295 = vunpack.c.0.s8 %v2294
        %v2296 = vlaneseq
        %v2297 = vshrl.u32 %v2296, 7
        %v2298 = vsub.s32 %v2295, %v2297
        %v2299 = vrot.slane %v2211, %v2298
        %v2300 = vcombine.low %v2292, %v2299
        %v2301 = vcombine.low %v2219, %v2227
        %v2303 = vunpack.c.l.s4 1983009808
        %v2304 = vunpack.c.0.s8 %v2303
        %v2305 = vlaneseq
        %v2306 = vshrl.u32 %v2305, 7
        %v2307 = vsub.s32 %v2304, %v2306
        %v2308 = vrot.slane %v2301, %v2307
        %v2310 = vunpack.c.l.s4 1983009808
        %v2311 = vunpack.c.0.s8 %v2310
        %v2312 = vlaneseq
        %v2313 = vshrl.u32 %v2312, 7
        %v2314 = vsub.s32 %v2311, %v2313
        %v2315 = vrot.slane %v2226, %v2314
        %v2316 = vcombine.low %v2308, %v2315
        %v2317 = vcombine.low %v2228, %v2235
        %v2319 = vunpack.c.l.s4 1983009808
        %v2320 = vunpack.c.0.s8 %v2319
        %v2321 = vlaneseq
        %v2322 = vshrl.u32 %v2321, 7
        %v2323 = vsub.s32 %v2320, %v2322
        %v2324 = vrot.slane %v2317, %v2323
        %v2326 = vunpack.c.l.s4 1983009808
        %v2327 = vunpack.c.0.s8 %v2326
        %v2328 = vlaneseq
        %v2329 = vshrl.u32 %v2328, 7
        %v2330 = vsub.s32 %v2327, %v2329
        %v2331 = vrot.slane %v2236, %v2330
        %v2332 = vcombine.low %v2324, %v2331
        %2339 = vst [vmem:[%s389] sm:$0x3f] %v2252
        %2340 = vst [vmem:[%s389 + $0x8] sm:$0x3f] %v2268
        %2341 = vst [vmem:[%s389 + $0x10] sm:$0x3f] %v2284
        %2342 = vst [vmem:[%s389 + $0x18] sm:$0x3f] %v2300
        %2343 = vst [vmem:[%s389 + $0x20] sm:$0x3f] %v2316
        %2344 = vst [vmem:[%s389 + $0x28] sm:$0x3f] %v2332
        %v2345 = vld [vmem:[#allocation2] sm:$0x1]
        %v2346 = vadd.f32 %v2151, %v2152
        %v2347 = vadd.f32 %v2346, %v2153
        %v2348 = vadd.f32 %v2347, %v2154
        %v2349 = vsel %vm717, %v2155, 0.0
        %v2350 = vadd.f32 %v2348, %v2349
        %v2351 = vrot.slane %v2350, 4
        %v2352 = vadd.f32 %v2350, %v2351
        %v2353 = vrot.slane %v2352, 2
        %v2354 = vadd.f32 %v2352, %v2353
        %v2355 = vrot.slane %v2354, 1
        %v2356 = vadd.f32 %v2354, %v2355
        %v2357 = vadd.f32 %v2345, %v2356
        %2358 = vst [vmem:[#allocation2] sm:$0x1] %v2357
        %v2359 = vld [vmem:[#allocation3] sm:$0x1]
        %v2360 = vmul.f32 %v2151, %v2151
        %v2361 = vmul.f32 %v2152, %v2152
        %v2362 = vmul.f32 %v2153, %v2153
        %v2363 = vmul.f32 %v2154, %v2154
        %v2364 = vmul.f32 %v2155, %v2155
        %v2365 = vadd.f32 %v2360, %v2361
        %v2366 = vadd.f32 %v2365, %v2362
        %v2367 = vadd.f32 %v2366, %v2363
        %v2368 = vsel %vm717, %v2364, 0.0
        %v2369 = vadd.f32 %v2367, %v2368
        %v2370 = vrot.slane %v2369, 4
        %v2371 = vadd.f32 %v2369, %v2370
        %v2372 = vrot.slane %v2371, 2
        %v2373 = vadd.f32 %v2371, %v2372
        %v2374 = vrot.slane %v2373, 1
        %v2375 = vadd.f32 %v2373, %v2374
        %v2376 = vadd.f32 %v2359, %v2375
        %2377 = vst [vmem:[#allocation3] sm:$0x1] %v2376
        %v2378 = vld [vmem:[#allocation2] sm:$0x1]
        %v2379 = vmul.f32 %v2378, 0.013888889
        %v2380 = vld [vmem:[#allocation3] sm:$0x1]
        %v2381 = vmul.f32 %v2380, 0.013888889
        %v2382 = vmul.f32 %v2379, %v2379
        %v2383 = vsub.f32 %v2381, %v2382
        %v2384 = vld [vmem:[%s5] sm:$0x1]
        %v2385 = vadd.f32 %v2383, 1e-05
        %v2386 = vrsqrt.pop %v2385
        %v2387 = vmul.f32 %v2384, %v2386
        %2388 = vst [vmem:[#allocation4] sm:$0x1] %v2387
        %v2389 = vld [vmem:[%s6] sm:$0x1]
        %v2390 = vmul.f32 %v2379, %v2387
        %v2391 = vsub.f32 %v2389, %v2390
        %2392 = vst [vmem:[#allocation6] sm:$0x1] %v2391
        %p2393 = scmp.lt.s32.totalorder %s23, 1
        %s2394 = scalar_select %p2393, %s23, 1
        %s2395 = smul.addr %s2394, 6
        %s2396 = smul.addr %s2395, 8
        %s2397 = scalar_lea.vmem %s7, %s2396
        // Predicated region
        $region53: #{tpu_custom_call.1} parent=47 // pred_check
          %p2398 = pneg %p208
        $region54: #{tpu_custom_call.1} parent=47 // pred_check_branch
          %2400 = sbr.rel (%p2398) target = $region56
        $region55: #{tpu_custom_call.1} parent=47 // pred_region
          _
        $region56: #{tpu_custom_call.1} parent=47 // pred_fallthru
          _
        // Predicated region
        $region57: #{tpu_custom_call.1} parent=47 // pred_check
          %p2401 = pneg %p229
        $region58: #{tpu_custom_call.1} parent=47 // pred_check_branch
          %2403 = sbr.rel (%p2401) target = $region60
        $region59: #{tpu_custom_call.1} parent=47 // pred_region
          %s2405 = ssub.s32 16, 16
          %2406 = vsyncadd [#allocation5], %s2405
          %s2408 = sshll.u32 [#allocation4], 4
          %s2409 = int_to_ptr.vmem [resolvable:$true] %s2408
          %2411 = dma.vmem_to_hbm [thread:$0]  %s2409, 16, %s8, [#allocation5]
        $region60: #{tpu_custom_call.1} parent=47 // pred_fallthru
          _
        // Predicated region
        $region61: #{tpu_custom_call.1} parent=47 // pred_check
          %p2412 = pneg %p250
        $region62: #{tpu_custom_call.1} parent=47 // pred_check_branch
          %2414 = sbr.rel (%p2412) target = $region64
        $region63: #{tpu_custom_call.1} parent=47 // pred_region
          %s2416 = ssub.s32 16, 16
          %2417 = vsyncadd [#allocation7], %s2416
          %s2419 = sshll.u32 [#allocation6], 4
          %s2420 = int_to_ptr.vmem [resolvable:$true] %s2419
          %2422 = dma.vmem_to_hbm [thread:$0]  %s2420, 16, %s9, [#allocation7]
        $region64: #{tpu_custom_call.1} parent=47 // pred_fallthru
          _
        // Predicated region
        $region65: #{tpu_custom_call.1} parent=47 // pred_check
          %p2423 = pneg %p229
        $region66: #{tpu_custom_call.1} parent=47 // pred_check_branch
          %2425 = sbr.rel (%p2423) target = $region68
        $region67: #{tpu_custom_call.1} parent=47 // pred_region
          %2426 = dma.done [#allocation5], 16
        $region68: #{tpu_custom_call.1} parent=47 // pred_fallthru
          _
        // Predicated region
        $region69: #{tpu_custom_call.1} parent=47 // pred_check
          %p2427 = pneg %p250
        $region70: #{tpu_custom_call.1} parent=47 // pred_check_branch
          %2429 = sbr.rel (%p2427) target = $region72
        $region71: #{tpu_custom_call.1} parent=47 // pred_region
          %2430 = dma.done [#allocation7], 16
        $region72: #{tpu_custom_call.1} parent=47 // pred_fallthru
          _
      $region48: #{tpu_custom_call.1} parent=5 // pred_fallthru
        _
      %p2431 = scmp.le.s32.totalorder 2, %s18
      // Predicated region
      $region73: #{tpu_custom_call.1} parent=5 // pred_check
        %p2432 = pneg %p2431
      $region74: #{tpu_custom_call.1} parent=5 // pred_check_branch
        %2434 = sbr.rel (%p2432) target = $region76
      $region75: #{tpu_custom_call.1} parent=5 // pred_region
        %s2435 = ssub.s32 %s18, 2
        // Predicated region
        $region77: #{tpu_custom_call.1} parent=75 // pred_check
          %p2436 = pneg %p214
        $region78: #{tpu_custom_call.1} parent=75 // pred_check_branch
          %2438 = sbr.rel (%p2436) target = $region80
        $region79: #{tpu_custom_call.1} parent=75 // pred_region
          %p2439 = scmp.lt.s32.totalorder %s24, 1
          %s2440 = scalar_select %p2439, %s24, 1
          %s2441 = smul.addr %s2440, 6
          %s2442 = smul.addr %s2441, 8
          %s2443 = scalar_lea.vmem %s7, %s2442
        $region80: #{tpu_custom_call.1} parent=75 // pred_fallthru
          _
      $region76: #{tpu_custom_call.1} parent=5 // pred_fallthru
        _
    $region6: #{tpu_custom_call.1} parent=1 // loop_footer
      %s22 = sadd.s32 1, %s18
    $region7: #{tpu_custom_call.1} parent=1 // loop_footer_branch
      %17 = sbr.rel target = $region3
    $region8: #{tpu_custom_call.1} parent=1 // loop_exit
      _
    %2444 = vsyncpa [#allocation5], 1
    %s2445 = scalar_lea.sflag [#allocation5], 1
    %2446 = vsyncpa %s2445, 1
    %2447 = vsyncpa [#allocation7], 1

</llo_original>
